<compile_context>
chip_gen: v7x
topology: tpu7x:2x2x1
jax: 0.10.0
libtpu: 0.0.40
codegen_flags: <defaults>
</compile_context>

<pallas_src>
import jax
import jax.numpy as jnp
from jax.experimental import pallas as pl
from jax.experimental.pallas import tpu as pltpu


# ---------------------------------------------------------------------------
# Fused kernel: in-kernel token gather -> LSTM recurrence (packed gates) ->
# classifier epilogue, all in one VMEM-resident pallas_call.
# ---------------------------------------------------------------------------
def _make_kernel(B, Bp, S, H):
    G4 = 4 * H  # packed gate width (128 when H=32: exactly one vreg of lanes)

    def kernel(sent_ref, table_ref, whh_ref, w1h_ref, w1c_ref, b1_ref,
               w2_ref, b2_ref, out_ref, gx_ref):
        # ---- Prologue: gather gate pre-activations from the fused table ----
        # gx_ref rows [t*Bp, t*Bp+Bp) hold step t; padded batch rows stay zero
        # (zero pre-activations keep padded h/c rows exactly zero).
        gx_ref[...] = jnp.zeros_like(gx_ref)
        for t in range(S):          # static Python loops: pure prologue
            for b in range(B):
                tok = sent_ref[b, t]                       # SMEM scalar read
                gx_ref[pl.ds(t * Bp + b, 1), :] = table_ref[pl.ds(tok, 1), :]

        # ---- Recurrence: only h @ W_hh (one MXU pass) is on the serial path -
        def step(t, carry):
            h, c = carry
            row0 = pl.multiple_of(t * Bp, Bp)
            gx_t = gx_ref[pl.ds(row0, Bp), :]              # (Bp, 4H)
            gates = gx_t + jnp.dot(h.astype(jnp.bfloat16), whh_ref[...],
                                   preferred_element_type=jnp.float32)
            # Packed gate order along lanes: [i | f | g | o], H lanes each.
            i_g = jax.nn.sigmoid(gates[:, 0 * H:1 * H])
            f_g = jax.nn.sigmoid(gates[:, 1 * H:2 * H])
            g_g = jnp.tanh(gates[:, 2 * H:3 * H])
            o_g = jax.nn.sigmoid(gates[:, 3 * H:4 * H])
            c_new = f_g * c + i_g * g_g                    # f32 carries
            h_new = o_g * jnp.tanh(c_new)
            return h_new, c_new

        h0 = jnp.zeros((Bp, H), jnp.float32)
        c0 = jnp.zeros((Bp, H), jnp.float32)
        hn, cn = jax.lax.fori_loop(0, S, step, (h0, c0), unroll=True)

        # ---- Classifier epilogue: [hn, cn] @ w1 + b1 -> ReLU -> (Dropout:
        # eval identity) -> @ w2 + b2.  w1 pre-split so no concat is needed;
        # bf16 MXU operands, f32 accumulation.
        z = (jnp.dot(hn.astype(jnp.bfloat16), w1h_ref[...],
                     preferred_element_type=jnp.float32)
             + jnp.dot(cn.astype(jnp.bfloat16), w1c_ref[...],
                       preferred_element_type=jnp.float32)
             + b1_ref[...])
        z = jnp.maximum(z, 0.0)
        out_ref[...] = (jnp.dot(z.astype(jnp.bfloat16), w2_ref[...],
                                preferred_element_type=jnp.float32)
                        + b2_ref[...])

    return kernel


# ---------------------------------------------------------------------------
# Wrapper: weights-only prep (fused table, splits, casts, pads) + pallas_call.
# In a serving setup the weight prep is per-model, not per-call.
# ---------------------------------------------------------------------------
def _round_up(x, m):
    return ((x + m - 1) // m) * m


def lstm_classifier_forward(sentence, params):
    """sentence: (B, S) int32 token ids.  Returns (B, n_labels) float32."""
    emb = params["emb"]          # (V, E)
    w_ih = params["w_ih"]        # (E, 4H)   pre-transposed, gate order [i,f,g,o]
    w_hh = params["w_hh"]        # (H, 4H)
    b_lstm = params["b_lstm"]    # (1, 4H)   b_ih + b_hh
    w1 = params["w1"]            # (2H, H)   rows [0:H] multiply hn, [H:2H] cn
    b1 = params["b1"]            # (1, H)
    w2 = params["w2"]            # (H, L)
    b2 = params["b2"]            # (1, L)

    B, S = sentence.shape
    H = w_hh.shape[0]
    L = w2.shape[1]
    G4 = 4 * H

    Bp = _round_up(max(B, 8), 8)        # sublane fill
    Lp = _round_up(max(L, 128), 128)    # lane-dense logit store

    # Fused embedding + input projection table: (V, 4H), gates packed.
    # padding_idx row of emb is zero -> its table row is just the bias,
    # matching x = 0 semantics.
    table = jnp.dot(emb, w_ih, preferred_element_type=jnp.float32) + b_lstm

    # Recurrent + classifier weights: bf16 for the MXU (f32 accumulation).
    whh = w_hh.astype(jnp.bfloat16)                         # (H, 4H)
    w1h = w1[:H].astype(jnp.bfloat16)                       # (H, H)
    w1c = w1[H:].astype(jnp.bfloat16)                       # (H, H)
    w2p = jnp.pad(w2, ((0, 0), (0, Lp - L))).astype(jnp.bfloat16)  # (H, Lp)
    b2p = jnp.pad(b2, ((0, 0), (0, Lp - L)))                # (1, Lp)

    kernel = _make_kernel(B, Bp, S, H)
    vmem = lambda: pl.BlockSpec(memory_space=pltpu.MemorySpace.VMEM)
    smem = pl.BlockSpec(memory_space=pltpu.MemorySpace.SMEM)

    out = pl.pallas_call(
        kernel,
        out_shape=jax.ShapeDtypeStruct((Bp, Lp), jnp.float32),
        in_specs=[smem] + [vmem() for _ in range(7)],
        out_specs=vmem(),
        scratch_shapes=[pltpu.VMEM((S * Bp, G4), jnp.float32)],  # gx buffer
    )(sentence.astype(jnp.int32), table, whh, w1h, w1c, b1, w2p, b2p)

    # Strip tile padding.
    return out[:B, :L]


# ---------------------------------------------------------------------------
# Pure-JAX reference (f32 everywhere) for a tolerance check.
# ---------------------------------------------------------------------------
def lstm_classifier_reference(sentence, params):
    emb, w_ih, w_hh = params["emb"], params["w_ih"], params["w_hh"]
    b_lstm, w1, b1 = params["b_lstm"], params["w1"], params["b1"]
    w2, b2 = params["w2"], params["b2"]
    B, S = sentence.shape
    H = w_hh.shape[0]
    x = emb[sentence]                                       # (B, S, E)
    h = jnp.zeros((B, H), jnp.float32)
    c = jnp.zeros((B, H), jnp.float32)
    for t in range(S):
        gates = x[:, t] @ w_ih + h @ w_hh + b_lstm
        i = jax.nn.sigmoid(gates[:, 0 * H:1 * H])
        f = jax.nn.sigmoid(gates[:, 1 * H:2 * H])
        g = jnp.tanh(gates[:, 2 * H:3 * H])
        o = jax.nn.sigmoid(gates[:, 3 * H:4 * H])
        c = f * c + i * g
        h = o * jnp.tanh(c)
    z = jnp.maximum(jnp.concatenate([h, c], axis=-1) @ w1 + b1, 0.0)
    return z @ w2 + b2   # Dropout(0.5) is eval-mode identity


# ---------------------------------------------------------------------------
# Parameter init (PyTorch-equivalent layouts, pre-transposed for right-mul).
# ---------------------------------------------------------------------------
def init_params(key, n_vocab, embed_dim, h_dim, n_labels, pad_idx=1):
    ks = jax.random.split(key, 8)
    scale = 0.1
    emb = scale * jax.random.normal(ks[0], (n_vocab, embed_dim), jnp.float32)
    emb = emb.at[pad_idx].set(0.0)  # nn.Embedding padding_idx row is zero

    # PyTorch LSTM: weight_ih (4H, E), weight_hh (4H, H), biases (4H,) x2,
    # gate order [i, f, g, o].  Stored pre-transposed for right-multiplication.
    w_ih = scale * jax.random.normal(ks[1], (embed_dim, 4 * h_dim), jnp.float32)
    w_hh = scale * jax.random.normal(ks[2], (h_dim, 4 * h_dim), jnp.float32)
    b_ih = scale * jax.random.normal(ks[3], (4 * h_dim,), jnp.float32)
    b_hh = scale * jax.random.normal(ks[4], (4 * h_dim,), jnp.float32)
    b_lstm = (b_ih + b_hh).reshape(1, 4 * h_dim)

    # Classifier: Linear(2H, H), Linear(H, n_labels); stored as (in, out).
    w1 = scale * jax.random.normal(ks[5], (2 * h_dim, h_dim), jnp.float32)
    b1 = scale * jax.random.normal(ks[6], (h_dim,), jnp.float32).reshape(1, h_dim)
    w2 = scale * jax.random.normal(ks[7], (h_dim, n_labels), jnp.float32)
    b2 = jnp.zeros((1, n_labels), jnp.float32)

    return dict(emb=emb, w_ih=w_ih, w_hh=w_hh, b_lstm=b_lstm,
                w1=w1, b1=b1, w2=w2, b2=b2)


if __name__ == "__main__":
    B, S = 2, 8
    n_vocab, embed_dim, h_dim, n_labels = 50, 32, 32, 4

    key = jax.random.PRNGKey(0)
    k_tok, k_par = jax.random.split(key)
    sentence = jax.random.randint(k_tok, (B, S), 0, n_vocab, dtype=jnp.int32)
    params = init_params(k_par, n_vocab, embed_dim, h_dim, n_labels)

    fwd = jax.jit(lstm_classifier_forward)
    out = jax.block_until_ready(fwd(sentence, params))

    assert out.shape == (B, n_labels) and out.dtype == jnp.float32
    assert bool(jnp.all(jnp.isfinite(out)))

    # Tolerance check vs pure-f32 reference (bf16 MXU operands in the kernel
    # introduce ~1e-3-scale rounding; not bit-exact by design).
    ref = lstm_classifier_reference(sentence, params)
    assert bool(jnp.allclose(out, ref, atol=5e-2, rtol=5e-2)), (out, ref)

    print("KERNEL_OK")
</pallas_src>

<mosaic_0001>
module attributes {stable_mosaic.version = 11 : i64} {
  func.func @kernel(%arg0: memref<2x8xi32, #tpu.memory_space<smem>>, %arg1: memref<50x128xf32, #tpu.memory_space<vmem>>, %arg2: memref<32x128xbf16, #tpu.memory_space<vmem>>, %arg3: memref<32x32xbf16, #tpu.memory_space<vmem>>, %arg4: memref<32x32xbf16, #tpu.memory_space<vmem>>, %arg5: memref<1x32xf32, #tpu.memory_space<vmem>>, %arg6: memref<32x128xbf16, #tpu.memory_space<vmem>>, %arg7: memref<1x128xf32, #tpu.memory_space<vmem>>, %arg8: memref<8x128xf32, #tpu.memory_space<vmem>>, %arg9: memref<64x128xf32, #tpu.memory_space<vmem>>) attributes {dimension_semantics = [], scalar_prefetch = 0 : i64, scratch_operands = 1 : i64, tpu.core_type = #tpu.core_type<tc>} {
    %cst = arith.constant 0.000000e+00 : f32
    %0 = vector.broadcast %cst : f32 to vector<64x128xf32>
    %c0 = arith.constant 0 : index
    %c0_0 = arith.constant 0 : index
    %1 = vector.load %arg9[%c0, %c0_0] : memref<64x128xf32, #tpu.memory_space<vmem>>, vector<64x128xf32>
    tpu.vector_store %arg9[%c0, %c0_0], %0 {strides = array<i32>} : memref<64x128xf32, #tpu.memory_space<vmem>>, vector<64x128xf32>,
    %c0_1 = arith.constant 0 : index
    %c0_2 = arith.constant 0 : index
    %2 = memref.load %arg0[%c0_1, %c0_2] : memref<2x8xi32, #tpu.memory_space<smem>>
    %3 = arith.index_cast %2 : i32 to index
    %c0_3 = arith.constant 0 : index
    %4 = vector.load %arg1[%3, %c0_3] : memref<50x128xf32, #tpu.memory_space<vmem>>, vector<1x128xf32>
    %c0_4 = arith.constant 0 : index
    %c0_5 = arith.constant 0 : index
    %5 = vector.load %arg9[%c0_4, %c0_5] : memref<64x128xf32, #tpu.memory_space<vmem>>, vector<1x128xf32>
    tpu.vector_store %arg9[%c0_4, %c0_5], %4 {strides = array<i32>} : memref<64x128xf32, #tpu.memory_space<vmem>>, vector<1x128xf32>,
    %c1 = arith.constant 1 : index
    %c0_6 = arith.constant 0 : index
    %6 = memref.load %arg0[%c1, %c0_6] : memref<2x8xi32, #tpu.memory_space<smem>>
    %7 = arith.index_cast %6 : i32 to index
    %c0_7 = arith.constant 0 : index
    %8 = vector.load %arg1[%7, %c0_7] : memref<50x128xf32, #tpu.memory_space<vmem>>, vector<1x128xf32>
    %c1_8 = arith.constant 1 : index
    %c0_9 = arith.constant 0 : index
    %9 = vector.load %arg9[%c1_8, %c0_9] : memref<64x128xf32, #tpu.memory_space<vmem>>, vector<1x128xf32>
    tpu.vector_store %arg9[%c1_8, %c0_9], %8 {strides = array<i32>} : memref<64x128xf32, #tpu.memory_space<vmem>>, vector<1x128xf32>,
    %c0_10 = arith.constant 0 : index
    %c1_11 = arith.constant 1 : index
    %10 = memref.load %arg0[%c0_10, %c1_11] : memref<2x8xi32, #tpu.memory_space<smem>>
    %11 = arith.index_cast %10 : i32 to index
    %c0_12 = arith.constant 0 : index
    %12 = vector.load %arg1[%11, %c0_12] : memref<50x128xf32, #tpu.memory_space<vmem>>, vector<1x128xf32>
    %c8 = arith.constant 8 : index
    %c0_13 = arith.constant 0 : index
    %13 = vector.load %arg9[%c8, %c0_13] : memref<64x128xf32, #tpu.memory_space<vmem>>, vector<1x128xf32>
    tpu.vector_store %arg9[%c8, %c0_13], %12 {strides = array<i32>} : memref<64x128xf32, #tpu.memory_space<vmem>>, vector<1x128xf32>,
    %c1_14 = arith.constant 1 : index
    %c1_15 = arith.constant 1 : index
    %14 = memref.load %arg0[%c1_14, %c1_15] : memref<2x8xi32, #tpu.memory_space<smem>>
    %15 = arith.index_cast %14 : i32 to index
    %c0_16 = arith.constant 0 : index
    %16 = vector.load %arg1[%15, %c0_16] : memref<50x128xf32, #tpu.memory_space<vmem>>, vector<1x128xf32>
    %c9 = arith.constant 9 : index
    %c0_17 = arith.constant 0 : index
    %17 = vector.load %arg9[%c9, %c0_17] : memref<64x128xf32, #tpu.memory_space<vmem>>, vector<1x128xf32>
    tpu.vector_store %arg9[%c9, %c0_17], %16 {strides = array<i32>} : memref<64x128xf32, #tpu.memory_space<vmem>>, vector<1x128xf32>,
    %c0_18 = arith.constant 0 : index
    %c2 = arith.constant 2 : index
    %18 = memref.load %arg0[%c0_18, %c2] : memref<2x8xi32, #tpu.memory_space<smem>>
    %19 = arith.index_cast %18 : i32 to index
    %c0_19 = arith.constant 0 : index
    %20 = vector.load %arg1[%19, %c0_19] : memref<50x128xf32, #tpu.memory_space<vmem>>, vector<1x128xf32>
    %c16 = arith.constant 16 : index
    %c0_20 = arith.constant 0 : index
    %21 = vector.load %arg9[%c16, %c0_20] : memref<64x128xf32, #tpu.memory_space<vmem>>, vector<1x128xf32>
    tpu.vector_store %arg9[%c16, %c0_20], %20 {strides = array<i32>} : memref<64x128xf32, #tpu.memory_space<vmem>>, vector<1x128xf32>,
    %c1_21 = arith.constant 1 : index
    %c2_22 = arith.constant 2 : index
    %22 = memref.load %arg0[%c1_21, %c2_22] : memref<2x8xi32, #tpu.memory_space<smem>>
    %23 = arith.index_cast %22 : i32 to index
    %c0_23 = arith.constant 0 : index
    %24 = vector.load %arg1[%23, %c0_23] : memref<50x128xf32, #tpu.memory_space<vmem>>, vector<1x128xf32>
    %c17 = arith.constant 17 : index
    %c0_24 = arith.constant 0 : index
    %25 = vector.load %arg9[%c17, %c0_24] : memref<64x128xf32, #tpu.memory_space<vmem>>, vector<1x128xf32>
    tpu.vector_store %arg9[%c17, %c0_24], %24 {strides = array<i32>} : memref<64x128xf32, #tpu.memory_space<vmem>>, vector<1x128xf32>,
    %c0_25 = arith.constant 0 : index
    %c3 = arith.constant 3 : index
    %26 = memref.load %arg0[%c0_25, %c3] : memref<2x8xi32, #tpu.memory_space<smem>>
    %27 = arith.index_cast %26 : i32 to index
    %c0_26 = arith.constant 0 : index
    %28 = vector.load %arg1[%27, %c0_26] : memref<50x128xf32, #tpu.memory_space<vmem>>, vector<1x128xf32>
    %c24 = arith.constant 24 : index
    %c0_27 = arith.constant 0 : index
    %29 = vector.load %arg9[%c24, %c0_27] : memref<64x128xf32, #tpu.memory_space<vmem>>, vector<1x128xf32>
    tpu.vector_store %arg9[%c24, %c0_27], %28 {strides = array<i32>} : memref<64x128xf32, #tpu.memory_space<vmem>>, vector<1x128xf32>,
    %c1_28 = arith.constant 1 : index
    %c3_29 = arith.constant 3 : index
    %30 = memref.load %arg0[%c1_28, %c3_29] : memref<2x8xi32, #tpu.memory_space<smem>>
    %31 = arith.index_cast %30 : i32 to index
    %c0_30 = arith.constant 0 : index
    %32 = vector.load %arg1[%31, %c0_30] : memref<50x128xf32, #tpu.memory_space<vmem>>, vector<1x128xf32>
    %c25 = arith.constant 25 : index
    %c0_31 = arith.constant 0 : index
    %33 = vector.load %arg9[%c25, %c0_31] : memref<64x128xf32, #tpu.memory_space<vmem>>, vector<1x128xf32>
    tpu.vector_store %arg9[%c25, %c0_31], %32 {strides = array<i32>} : memref<64x128xf32, #tpu.memory_space<vmem>>, vector<1x128xf32>,
    %c0_32 = arith.constant 0 : index
    %c4 = arith.constant 4 : index
    %34 = memref.load %arg0[%c0_32, %c4] : memref<2x8xi32, #tpu.memory_space<smem>>
    %35 = arith.index_cast %34 : i32 to index
    %c0_33 = arith.constant 0 : index
    %36 = vector.load %arg1[%35, %c0_33] : memref<50x128xf32, #tpu.memory_space<vmem>>, vector<1x128xf32>
    %c32 = arith.constant 32 : index
    %c0_34 = arith.constant 0 : index
    %37 = vector.load %arg9[%c32, %c0_34] : memref<64x128xf32, #tpu.memory_space<vmem>>, vector<1x128xf32>
    tpu.vector_store %arg9[%c32, %c0_34], %36 {strides = array<i32>} : memref<64x128xf32, #tpu.memory_space<vmem>>, vector<1x128xf32>,
    %c1_35 = arith.constant 1 : index
    %c4_36 = arith.constant 4 : index
    %38 = memref.load %arg0[%c1_35, %c4_36] : memref<2x8xi32, #tpu.memory_space<smem>>
    %39 = arith.index_cast %38 : i32 to index
    %c0_37 = arith.constant 0 : index
    %40 = vector.load %arg1[%39, %c0_37] : memref<50x128xf32, #tpu.memory_space<vmem>>, vector<1x128xf32>
    %c33 = arith.constant 33 : index
    %c0_38 = arith.constant 0 : index
    %41 = vector.load %arg9[%c33, %c0_38] : memref<64x128xf32, #tpu.memory_space<vmem>>, vector<1x128xf32>
    tpu.vector_store %arg9[%c33, %c0_38], %40 {strides = array<i32>} : memref<64x128xf32, #tpu.memory_space<vmem>>, vector<1x128xf32>,
    %c0_39 = arith.constant 0 : index
    %c5 = arith.constant 5 : index
    %42 = memref.load %arg0[%c0_39, %c5] : memref<2x8xi32, #tpu.memory_space<smem>>
    %43 = arith.index_cast %42 : i32 to index
    %c0_40 = arith.constant 0 : index
    %44 = vector.load %arg1[%43, %c0_40] : memref<50x128xf32, #tpu.memory_space<vmem>>, vector<1x128xf32>
    %c40 = arith.constant 40 : index
    %c0_41 = arith.constant 0 : index
    %45 = vector.load %arg9[%c40, %c0_41] : memref<64x128xf32, #tpu.memory_space<vmem>>, vector<1x128xf32>
    tpu.vector_store %arg9[%c40, %c0_41], %44 {strides = array<i32>} : memref<64x128xf32, #tpu.memory_space<vmem>>, vector<1x128xf32>,
    %c1_42 = arith.constant 1 : index
    %c5_43 = arith.constant 5 : index
    %46 = memref.load %arg0[%c1_42, %c5_43] : memref<2x8xi32, #tpu.memory_space<smem>>
    %47 = arith.index_cast %46 : i32 to index
    %c0_44 = arith.constant 0 : index
    %48 = vector.load %arg1[%47, %c0_44] : memref<50x128xf32, #tpu.memory_space<vmem>>, vector<1x128xf32>
    %c41 = arith.constant 41 : index
    %c0_45 = arith.constant 0 : index
    %49 = vector.load %arg9[%c41, %c0_45] : memref<64x128xf32, #tpu.memory_space<vmem>>, vector<1x128xf32>
    tpu.vector_store %arg9[%c41, %c0_45], %48 {strides = array<i32>} : memref<64x128xf32, #tpu.memory_space<vmem>>, vector<1x128xf32>,
    %c0_46 = arith.constant 0 : index
    %c6 = arith.constant 6 : index
    %50 = memref.load %arg0[%c0_46, %c6] : memref<2x8xi32, #tpu.memory_space<smem>>
    %51 = arith.index_cast %50 : i32 to index
    %c0_47 = arith.constant 0 : index
    %52 = vector.load %arg1[%51, %c0_47] : memref<50x128xf32, #tpu.memory_space<vmem>>, vector<1x128xf32>
    %c48 = arith.constant 48 : index
    %c0_48 = arith.constant 0 : index
    %53 = vector.load %arg9[%c48, %c0_48] : memref<64x128xf32, #tpu.memory_space<vmem>>, vector<1x128xf32>
    tpu.vector_store %arg9[%c48, %c0_48], %52 {strides = array<i32>} : memref<64x128xf32, #tpu.memory_space<vmem>>, vector<1x128xf32>,
    %c1_49 = arith.constant 1 : index
    %c6_50 = arith.constant 6 : index
    %54 = memref.load %arg0[%c1_49, %c6_50] : memref<2x8xi32, #tpu.memory_space<smem>>
    %55 = arith.index_cast %54 : i32 to index
    %c0_51 = arith.constant 0 : index
    %56 = vector.load %arg1[%55, %c0_51] : memref<50x128xf32, #tpu.memory_space<vmem>>, vector<1x128xf32>
    %c49 = arith.constant 49 : index
    %c0_52 = arith.constant 0 : index
    %57 = vector.load %arg9[%c49, %c0_52] : memref<64x128xf32, #tpu.memory_space<vmem>>, vector<1x128xf32>
    tpu.vector_store %arg9[%c49, %c0_52], %56 {strides = array<i32>} : memref<64x128xf32, #tpu.memory_space<vmem>>, vector<1x128xf32>,
    %c0_53 = arith.constant 0 : index
    %c7 = arith.constant 7 : index
    %58 = memref.load %arg0[%c0_53, %c7] : memref<2x8xi32, #tpu.memory_space<smem>>
    %59 = arith.index_cast %58 : i32 to index
    %c0_54 = arith.constant 0 : index
    %60 = vector.load %arg1[%59, %c0_54] : memref<50x128xf32, #tpu.memory_space<vmem>>, vector<1x128xf32>
    %c56 = arith.constant 56 : index
    %c0_55 = arith.constant 0 : index
    %61 = vector.load %arg9[%c56, %c0_55] : memref<64x128xf32, #tpu.memory_space<vmem>>, vector<1x128xf32>
    tpu.vector_store %arg9[%c56, %c0_55], %60 {strides = array<i32>} : memref<64x128xf32, #tpu.memory_space<vmem>>, vector<1x128xf32>,
    %c1_56 = arith.constant 1 : index
    %c7_57 = arith.constant 7 : index
    %62 = memref.load %arg0[%c1_56, %c7_57] : memref<2x8xi32, #tpu.memory_space<smem>>
    %63 = arith.index_cast %62 : i32 to index
    %c0_58 = arith.constant 0 : index
    %64 = vector.load %arg1[%63, %c0_58] : memref<50x128xf32, #tpu.memory_space<vmem>>, vector<1x128xf32>
    %c57 = arith.constant 57 : index
    %c0_59 = arith.constant 0 : index
    %65 = vector.load %arg9[%c57, %c0_59] : memref<64x128xf32, #tpu.memory_space<vmem>>, vector<1x128xf32>
    tpu.vector_store %arg9[%c57, %c0_59], %64 {strides = array<i32>} : memref<64x128xf32, #tpu.memory_space<vmem>>, vector<1x128xf32>,
    %cst_60 = arith.constant 0.000000e+00 : f32
    %66 = vector.broadcast %cst_60 : f32 to vector<8x32xf32>
    %cst_61 = arith.constant 0.000000e+00 : f32
    %67 = vector.broadcast %cst_61 : f32 to vector<8x32xf32>
    %c0_i32 = arith.constant 0 : i32
    %c8_i32 = arith.constant 8 : i32
    %68 = arith.muli %c0_i32, %c8_i32 : i32
    %69 = tpu.assume_multiple %68, 8 : i32
    %70 = arith.index_cast %69 : i32 to index
    %c0_62 = arith.constant 0 : index
    %71 = vector.load %arg9[%70, %c0_62] : memref<64x128xf32, #tpu.memory_space<vmem>>, vector<8x128xf32>
    %72 = arith.truncf %66 : vector<8x32xf32> to vector<8x32xbf16>
    %c0_63 = arith.constant 0 : index
    %c0_64 = arith.constant 0 : index
    %73 = vector.load %arg2[%c0_63, %c0_64] : memref<32x128xbf16, #tpu.memory_space<vmem>>, vector<32x128xbf16>
    %cst_65 = arith.constant dense<0.000000e+00> : vector<8x128xf32>
    %74 = tpu.matmul %72, %73, %cst_65 {dimension_numbers = #tpu.dot_dimension_numbers<[1], [0], [0], [1], [0, 0, 1, 1], [], []>} : vector<8x32xbf16>, vector<32x128xbf16>, vector<8x128xf32> -> vector<8x128xf32>
    %75 = arith.addf %71, %74 : vector<8x128xf32>
    %76 = vector.extract_strided_slice %75 {offsets = [0, 0], sizes = [8, 32], strides = [1, 1]} : vector<8x128xf32> to vector<8x32xf32>
    %77 = arith.negf %76 : vector<8x32xf32>
    %78 = math.exp %77 : vector<8x32xf32>
    %cst_66 = arith.constant 1.000000e+00 : f32
    %79 = vector.broadcast %cst_66 : f32 to vector<8x32xf32>
    %80 = arith.addf %79, %78 : vector<8x32xf32>
    %81 = arith.divf %79, %80 : vector<8x32xf32>
    %82 = vector.extract_strided_slice %75 {offsets = [0, 32], sizes = [8, 32], strides = [1, 1]} : vector<8x128xf32> to vector<8x32xf32>
    %83 = arith.negf %82 : vector<8x32xf32>
    %84 = math.exp %83 : vector<8x32xf32>
    %cst_67 = arith.constant 1.000000e+00 : f32
    %85 = vector.broadcast %cst_67 : f32 to vector<8x32xf32>
    %86 = arith.addf %85, %84 : vector<8x32xf32>
    %87 = arith.divf %85, %86 : vector<8x32xf32>
    %88 = vector.extract_strided_slice %75 {offsets = [0, 64], sizes = [8, 32], strides = [1, 1]} : vector<8x128xf32> to vector<8x32xf32>
    %89 = math.tanh %88 : vector<8x32xf32>
    %90 = vector.extract_strided_slice %75 {offsets = [0, 96], sizes = [8, 32], strides = [1, 1]} : vector<8x128xf32> to vector<8x32xf32>
    %91 = arith.negf %90 : vector<8x32xf32>
    %92 = math.exp %91 : vector<8x32xf32>
    %cst_68 = arith.constant 1.000000e+00 : f32
    %93 = vector.broadcast %cst_68 : f32 to vector<8x32xf32>
    %94 = arith.addf %93, %92 : vector<8x32xf32>
    %95 = arith.divf %93, %94 : vector<8x32xf32>
    %96 = arith.mulf %87, %67 : vector<8x32xf32>
    %97 = arith.mulf %81, %89 : vector<8x32xf32>
    %98 = arith.addf %96, %97 : vector<8x32xf32>
    %99 = math.tanh %98 : vector<8x32xf32>
    %100 = arith.mulf %95, %99 : vector<8x32xf32>
    %c1_i32 = arith.constant 1 : i32
    %c8_i32_69 = arith.constant 8 : i32
    %101 = arith.muli %c1_i32, %c8_i32_69 : i32
    %102 = tpu.assume_multiple %101, 8 : i32
    %103 = arith.index_cast %102 : i32 to index
    %c0_70 = arith.constant 0 : index
    %104 = vector.load %arg9[%103, %c0_70] : memref<64x128xf32, #tpu.memory_space<vmem>>, vector<8x128xf32>
    %105 = arith.truncf %100 : vector<8x32xf32> to vector<8x32xbf16>
    %c0_71 = arith.constant 0 : index
    %c0_72 = arith.constant 0 : index
    %106 = vector.load %arg2[%c0_71, %c0_72] : memref<32x128xbf16, #tpu.memory_space<vmem>>, vector<32x128xbf16>
    %cst_73 = arith.constant dense<0.000000e+00> : vector<8x128xf32>
    %107 = tpu.matmul %105, %106, %cst_73 {dimension_numbers = #tpu.dot_dimension_numbers<[1], [0], [0], [1], [0, 0, 1, 1], [], []>} : vector<8x32xbf16>, vector<32x128xbf16>, vector<8x128xf32> -> vector<8x128xf32>
    %108 = arith.addf %104, %107 : vector<8x128xf32>
    %109 = vector.extract_strided_slice %108 {offsets = [0, 0], sizes = [8, 32], strides = [1, 1]} : vector<8x128xf32> to vector<8x32xf32>
    %110 = arith.negf %109 : vector<8x32xf32>
    %111 = math.exp %110 : vector<8x32xf32>
    %cst_74 = arith.constant 1.000000e+00 : f32
    %112 = vector.broadcast %cst_74 : f32 to vector<8x32xf32>
    %113 = arith.addf %112, %111 : vector<8x32xf32>
    %114 = arith.divf %112, %113 : vector<8x32xf32>
    %115 = vector.extract_strided_slice %108 {offsets = [0, 32], sizes = [8, 32], strides = [1, 1]} : vector<8x128xf32> to vector<8x32xf32>
    %116 = arith.negf %115 : vector<8x32xf32>
    %117 = math.exp %116 : vector<8x32xf32>
    %cst_75 = arith.constant 1.000000e+00 : f32
    %118 = vector.broadcast %cst_75 : f32 to vector<8x32xf32>
    %119 = arith.addf %118, %117 : vector<8x32xf32>
    %120 = arith.divf %118, %119 : vector<8x32xf32>
    %121 = vector.extract_strided_slice %108 {offsets = [0, 64], sizes = [8, 32], strides = [1, 1]} : vector<8x128xf32> to vector<8x32xf32>
    %122 = math.tanh %121 : vector<8x32xf32>
    %123 = vector.extract_strided_slice %108 {offsets = [0, 96], sizes = [8, 32], strides = [1, 1]} : vector<8x128xf32> to vector<8x32xf32>
    %124 = arith.negf %123 : vector<8x32xf32>
    %125 = math.exp %124 : vector<8x32xf32>
    %cst_76 = arith.constant 1.000000e+00 : f32
    %126 = vector.broadcast %cst_76 : f32 to vector<8x32xf32>
    %127 = arith.addf %126, %125 : vector<8x32xf32>
    %128 = arith.divf %126, %127 : vector<8x32xf32>
    %129 = arith.mulf %120, %98 : vector<8x32xf32>
    %130 = arith.mulf %114, %122 : vector<8x32xf32>
    %131 = arith.addf %129, %130 : vector<8x32xf32>
    %132 = math.tanh %131 : vector<8x32xf32>
    %133 = arith.mulf %128, %132 : vector<8x32xf32>
    %c2_i32 = arith.constant 2 : i32
    %c8_i32_77 = arith.constant 8 : i32
    %134 = arith.muli %c2_i32, %c8_i32_77 : i32
    %135 = tpu.assume_multiple %134, 8 : i32
    %136 = arith.index_cast %135 : i32 to index
    %c0_78 = arith.constant 0 : index
    %137 = vector.load %arg9[%136, %c0_78] : memref<64x128xf32, #tpu.memory_space<vmem>>, vector<8x128xf32>
    %138 = arith.truncf %133 : vector<8x32xf32> to vector<8x32xbf16>
    %c0_79 = arith.constant 0 : index
    %c0_80 = arith.constant 0 : index
    %139 = vector.load %arg2[%c0_79, %c0_80] : memref<32x128xbf16, #tpu.memory_space<vmem>>, vector<32x128xbf16>
    %cst_81 = arith.constant dense<0.000000e+00> : vector<8x128xf32>
    %140 = tpu.matmul %138, %139, %cst_81 {dimension_numbers = #tpu.dot_dimension_numbers<[1], [0], [0], [1], [0, 0, 1, 1], [], []>} : vector<8x32xbf16>, vector<32x128xbf16>, vector<8x128xf32> -> vector<8x128xf32>
    %141 = arith.addf %137, %140 : vector<8x128xf32>
    %142 = vector.extract_strided_slice %141 {offsets = [0, 0], sizes = [8, 32], strides = [1, 1]} : vector<8x128xf32> to vector<8x32xf32>
    %143 = arith.negf %142 : vector<8x32xf32>
    %144 = math.exp %143 : vector<8x32xf32>
    %cst_82 = arith.constant 1.000000e+00 : f32
    %145 = vector.broadcast %cst_82 : f32 to vector<8x32xf32>
    %146 = arith.addf %145, %144 : vector<8x32xf32>
    %147 = arith.divf %145, %146 : vector<8x32xf32>
    %148 = vector.extract_strided_slice %141 {offsets = [0, 32], sizes = [8, 32], strides = [1, 1]} : vector<8x128xf32> to vector<8x32xf32>
    %149 = arith.negf %148 : vector<8x32xf32>
    %150 = math.exp %149 : vector<8x32xf32>
    %cst_83 = arith.constant 1.000000e+00 : f32
    %151 = vector.broadcast %cst_83 : f32 to vector<8x32xf32>
    %152 = arith.addf %151, %150 : vector<8x32xf32>
    %153 = arith.divf %151, %152 : vector<8x32xf32>
    %154 = vector.extract_strided_slice %141 {offsets = [0, 64], sizes = [8, 32], strides = [1, 1]} : vector<8x128xf32> to vector<8x32xf32>
    %155 = math.tanh %154 : vector<8x32xf32>
    %156 = vector.extract_strided_slice %141 {offsets = [0, 96], sizes = [8, 32], strides = [1, 1]} : vector<8x128xf32> to vector<8x32xf32>
    %157 = arith.negf %156 : vector<8x32xf32>
    %158 = math.exp %157 : vector<8x32xf32>
    %cst_84 = arith.constant 1.000000e+00 : f32
    %159 = vector.broadcast %cst_84 : f32 to vector<8x32xf32>
    %160 = arith.addf %159, %158 : vector<8x32xf32>
    %161 = arith.divf %159, %160 : vector<8x32xf32>
    %162 = arith.mulf %153, %131 : vector<8x32xf32>
    %163 = arith.mulf %147, %155 : vector<8x32xf32>
    %164 = arith.addf %162, %163 : vector<8x32xf32>
    %165 = math.tanh %164 : vector<8x32xf32>
    %166 = arith.mulf %161, %165 : vector<8x32xf32>
    %c3_i32 = arith.constant 3 : i32
    %c8_i32_85 = arith.constant 8 : i32
    %167 = arith.muli %c3_i32, %c8_i32_85 : i32
    %168 = tpu.assume_multiple %167, 8 : i32
    %169 = arith.index_cast %168 : i32 to index
    %c0_86 = arith.constant 0 : index
    %170 = vector.load %arg9[%169, %c0_86] : memref<64x128xf32, #tpu.memory_space<vmem>>, vector<8x128xf32>
    %171 = arith.truncf %166 : vector<8x32xf32> to vector<8x32xbf16>
    %c0_87 = arith.constant 0 : index
    %c0_88 = arith.constant 0 : index
    %172 = vector.load %arg2[%c0_87, %c0_88] : memref<32x128xbf16, #tpu.memory_space<vmem>>, vector<32x128xbf16>
    %cst_89 = arith.constant dense<0.000000e+00> : vector<8x128xf32>
    %173 = tpu.matmul %171, %172, %cst_89 {dimension_numbers = #tpu.dot_dimension_numbers<[1], [0], [0], [1], [0, 0, 1, 1], [], []>} : vector<8x32xbf16>, vector<32x128xbf16>, vector<8x128xf32> -> vector<8x128xf32>
    %174 = arith.addf %170, %173 : vector<8x128xf32>
    %175 = vector.extract_strided_slice %174 {offsets = [0, 0], sizes = [8, 32], strides = [1, 1]} : vector<8x128xf32> to vector<8x32xf32>
    %176 = arith.negf %175 : vector<8x32xf32>
    %177 = math.exp %176 : vector<8x32xf32>
    %cst_90 = arith.constant 1.000000e+00 : f32
    %178 = vector.broadcast %cst_90 : f32 to vector<8x32xf32>
    %179 = arith.addf %178, %177 : vector<8x32xf32>
    %180 = arith.divf %178, %179 : vector<8x32xf32>
    %181 = vector.extract_strided_slice %174 {offsets = [0, 32], sizes = [8, 32], strides = [1, 1]} : vector<8x128xf32> to vector<8x32xf32>
    %182 = arith.negf %181 : vector<8x32xf32>
    %183 = math.exp %182 : vector<8x32xf32>
    %cst_91 = arith.constant 1.000000e+00 : f32
    %184 = vector.broadcast %cst_91 : f32 to vector<8x32xf32>
    %185 = arith.addf %184, %183 : vector<8x32xf32>
    %186 = arith.divf %184, %185 : vector<8x32xf32>
    %187 = vector.extract_strided_slice %174 {offsets = [0, 64], sizes = [8, 32], strides = [1, 1]} : vector<8x128xf32> to vector<8x32xf32>
    %188 = math.tanh %187 : vector<8x32xf32>
    %189 = vector.extract_strided_slice %174 {offsets = [0, 96], sizes = [8, 32], strides = [1, 1]} : vector<8x128xf32> to vector<8x32xf32>
    %190 = arith.negf %189 : vector<8x32xf32>
    %191 = math.exp %190 : vector<8x32xf32>
    %cst_92 = arith.constant 1.000000e+00 : f32
    %192 = vector.broadcast %cst_92 : f32 to vector<8x32xf32>
    %193 = arith.addf %192, %191 : vector<8x32xf32>
    %194 = arith.divf %192, %193 : vector<8x32xf32>
    %195 = arith.mulf %186, %164 : vector<8x32xf32>
    %196 = arith.mulf %180, %188 : vector<8x32xf32>
    %197 = arith.addf %195, %196 : vector<8x32xf32>
    %198 = math.tanh %197 : vector<8x32xf32>
    %199 = arith.mulf %194, %198 : vector<8x32xf32>
    %c4_i32 = arith.constant 4 : i32
    %c8_i32_93 = arith.constant 8 : i32
    %200 = arith.muli %c4_i32, %c8_i32_93 : i32
    %201 = tpu.assume_multiple %200, 8 : i32
    %202 = arith.index_cast %201 : i32 to index
    %c0_94 = arith.constant 0 : index
    %203 = vector.load %arg9[%202, %c0_94] : memref<64x128xf32, #tpu.memory_space<vmem>>, vector<8x128xf32>
    %204 = arith.truncf %199 : vector<8x32xf32> to vector<8x32xbf16>
    %c0_95 = arith.constant 0 : index
    %c0_96 = arith.constant 0 : index
    %205 = vector.load %arg2[%c0_95, %c0_96] : memref<32x128xbf16, #tpu.memory_space<vmem>>, vector<32x128xbf16>
    %cst_97 = arith.constant dense<0.000000e+00> : vector<8x128xf32>
    %206 = tpu.matmul %204, %205, %cst_97 {dimension_numbers = #tpu.dot_dimension_numbers<[1], [0], [0], [1], [0, 0, 1, 1], [], []>} : vector<8x32xbf16>, vector<32x128xbf16>, vector<8x128xf32> -> vector<8x128xf32>
    %207 = arith.addf %203, %206 : vector<8x128xf32>
    %208 = vector.extract_strided_slice %207 {offsets = [0, 0], sizes = [8, 32], strides = [1, 1]} : vector<8x128xf32> to vector<8x32xf32>
    %209 = arith.negf %208 : vector<8x32xf32>
    %210 = math.exp %209 : vector<8x32xf32>
    %cst_98 = arith.constant 1.000000e+00 : f32
    %211 = vector.broadcast %cst_98 : f32 to vector<8x32xf32>
    %212 = arith.addf %211, %210 : vector<8x32xf32>
    %213 = arith.divf %211, %212 : vector<8x32xf32>
    %214 = vector.extract_strided_slice %207 {offsets = [0, 32], sizes = [8, 32], strides = [1, 1]} : vector<8x128xf32> to vector<8x32xf32>
    %215 = arith.negf %214 : vector<8x32xf32>
    %216 = math.exp %215 : vector<8x32xf32>
    %cst_99 = arith.constant 1.000000e+00 : f32
    %217 = vector.broadcast %cst_99 : f32 to vector<8x32xf32>
    %218 = arith.addf %217, %216 : vector<8x32xf32>
    %219 = arith.divf %217, %218 : vector<8x32xf32>
    %220 = vector.extract_strided_slice %207 {offsets = [0, 64], sizes = [8, 32], strides = [1, 1]} : vector<8x128xf32> to vector<8x32xf32>
    %221 = math.tanh %220 : vector<8x32xf32>
    %222 = vector.extract_strided_slice %207 {offsets = [0, 96], sizes = [8, 32], strides = [1, 1]} : vector<8x128xf32> to vector<8x32xf32>
    %223 = arith.negf %222 : vector<8x32xf32>
    %224 = math.exp %223 : vector<8x32xf32>
    %cst_100 = arith.constant 1.000000e+00 : f32
    %225 = vector.broadcast %cst_100 : f32 to vector<8x32xf32>
    %226 = arith.addf %225, %224 : vector<8x32xf32>
    %227 = arith.divf %225, %226 : vector<8x32xf32>
    %228 = arith.mulf %219, %197 : vector<8x32xf32>
    %229 = arith.mulf %213, %221 : vector<8x32xf32>
    %230 = arith.addf %228, %229 : vector<8x32xf32>
    %231 = math.tanh %230 : vector<8x32xf32>
    %232 = arith.mulf %227, %231 : vector<8x32xf32>
    %c5_i32 = arith.constant 5 : i32
    %c8_i32_101 = arith.constant 8 : i32
    %233 = arith.muli %c5_i32, %c8_i32_101 : i32
    %234 = tpu.assume_multiple %233, 8 : i32
    %235 = arith.index_cast %234 : i32 to index
    %c0_102 = arith.constant 0 : index
    %236 = vector.load %arg9[%235, %c0_102] : memref<64x128xf32, #tpu.memory_space<vmem>>, vector<8x128xf32>
    %237 = arith.truncf %232 : vector<8x32xf32> to vector<8x32xbf16>
    %c0_103 = arith.constant 0 : index
    %c0_104 = arith.constant 0 : index
    %238 = vector.load %arg2[%c0_103, %c0_104] : memref<32x128xbf16, #tpu.memory_space<vmem>>, vector<32x128xbf16>
    %cst_105 = arith.constant dense<0.000000e+00> : vector<8x128xf32>
    %239 = tpu.matmul %237, %238, %cst_105 {dimension_numbers = #tpu.dot_dimension_numbers<[1], [0], [0], [1], [0, 0, 1, 1], [], []>} : vector<8x32xbf16>, vector<32x128xbf16>, vector<8x128xf32> -> vector<8x128xf32>
    %240 = arith.addf %236, %239 : vector<8x128xf32>
    %241 = vector.extract_strided_slice %240 {offsets = [0, 0], sizes = [8, 32], strides = [1, 1]} : vector<8x128xf32> to vector<8x32xf32>
    %242 = arith.negf %241 : vector<8x32xf32>
    %243 = math.exp %242 : vector<8x32xf32>
    %cst_106 = arith.constant 1.000000e+00 : f32
    %244 = vector.broadcast %cst_106 : f32 to vector<8x32xf32>
    %245 = arith.addf %244, %243 : vector<8x32xf32>
    %246 = arith.divf %244, %245 : vector<8x32xf32>
    %247 = vector.extract_strided_slice %240 {offsets = [0, 32], sizes = [8, 32], strides = [1, 1]} : vector<8x128xf32> to vector<8x32xf32>
    %248 = arith.negf %247 : vector<8x32xf32>
    %249 = math.exp %248 : vector<8x32xf32>
    %cst_107 = arith.constant 1.000000e+00 : f32
    %250 = vector.broadcast %cst_107 : f32 to vector<8x32xf32>
    %251 = arith.addf %250, %249 : vector<8x32xf32>
    %252 = arith.divf %250, %251 : vector<8x32xf32>
    %253 = vector.extract_strided_slice %240 {offsets = [0, 64], sizes = [8, 32], strides = [1, 1]} : vector<8x128xf32> to vector<8x32xf32>
    %254 = math.tanh %253 : vector<8x32xf32>
    %255 = vector.extract_strided_slice %240 {offsets = [0, 96], sizes = [8, 32], strides = [1, 1]} : vector<8x128xf32> to vector<8x32xf32>
    %256 = arith.negf %255 : vector<8x32xf32>
    %257 = math.exp %256 : vector<8x32xf32>
    %cst_108 = arith.constant 1.000000e+00 : f32
    %258 = vector.broadcast %cst_108 : f32 to vector<8x32xf32>
    %259 = arith.addf %258, %257 : vector<8x32xf32>
    %260 = arith.divf %258, %259 : vector<8x32xf32>
    %261 = arith.mulf %252, %230 : vector<8x32xf32>
    %262 = arith.mulf %246, %254 : vector<8x32xf32>
    %263 = arith.addf %261, %262 : vector<8x32xf32>
    %264 = math.tanh %263 : vector<8x32xf32>
    %265 = arith.mulf %260, %264 : vector<8x32xf32>
    %c6_i32 = arith.constant 6 : i32
    %c8_i32_109 = arith.constant 8 : i32
    %266 = arith.muli %c6_i32, %c8_i32_109 : i32
    %267 = tpu.assume_multiple %266, 8 : i32
    %268 = arith.index_cast %267 : i32 to index
    %c0_110 = arith.constant 0 : index
    %269 = vector.load %arg9[%268, %c0_110] : memref<64x128xf32, #tpu.memory_space<vmem>>, vector<8x128xf32>
    %270 = arith.truncf %265 : vector<8x32xf32> to vector<8x32xbf16>
    %c0_111 = arith.constant 0 : index
    %c0_112 = arith.constant 0 : index
    %271 = vector.load %arg2[%c0_111, %c0_112] : memref<32x128xbf16, #tpu.memory_space<vmem>>, vector<32x128xbf16>
    %cst_113 = arith.constant dense<0.000000e+00> : vector<8x128xf32>
    %272 = tpu.matmul %270, %271, %cst_113 {dimension_numbers = #tpu.dot_dimension_numbers<[1], [0], [0], [1], [0, 0, 1, 1], [], []>} : vector<8x32xbf16>, vector<32x128xbf16>, vector<8x128xf32> -> vector<8x128xf32>
    %273 = arith.addf %269, %272 : vector<8x128xf32>
    %274 = vector.extract_strided_slice %273 {offsets = [0, 0], sizes = [8, 32], strides = [1, 1]} : vector<8x128xf32> to vector<8x32xf32>
    %275 = arith.negf %274 : vector<8x32xf32>
    %276 = math.exp %275 : vector<8x32xf32>
    %cst_114 = arith.constant 1.000000e+00 : f32
    %277 = vector.broadcast %cst_114 : f32 to vector<8x32xf32>
    %278 = arith.addf %277, %276 : vector<8x32xf32>
    %279 = arith.divf %277, %278 : vector<8x32xf32>
    %280 = vector.extract_strided_slice %273 {offsets = [0, 32], sizes = [8, 32], strides = [1, 1]} : vector<8x128xf32> to vector<8x32xf32>
    %281 = arith.negf %280 : vector<8x32xf32>
    %282 = math.exp %281 : vector<8x32xf32>
    %cst_115 = arith.constant 1.000000e+00 : f32
    %283 = vector.broadcast %cst_115 : f32 to vector<8x32xf32>
    %284 = arith.addf %283, %282 : vector<8x32xf32>
    %285 = arith.divf %283, %284 : vector<8x32xf32>
    %286 = vector.extract_strided_slice %273 {offsets = [0, 64], sizes = [8, 32], strides = [1, 1]} : vector<8x128xf32> to vector<8x32xf32>
    %287 = math.tanh %286 : vector<8x32xf32>
    %288 = vector.extract_strided_slice %273 {offsets = [0, 96], sizes = [8, 32], strides = [1, 1]} : vector<8x128xf32> to vector<8x32xf32>
    %289 = arith.negf %288 : vector<8x32xf32>
    %290 = math.exp %289 : vector<8x32xf32>
    %cst_116 = arith.constant 1.000000e+00 : f32
    %291 = vector.broadcast %cst_116 : f32 to vector<8x32xf32>
    %292 = arith.addf %291, %290 : vector<8x32xf32>
    %293 = arith.divf %291, %292 : vector<8x32xf32>
    %294 = arith.mulf %285, %263 : vector<8x32xf32>
    %295 = arith.mulf %279, %287 : vector<8x32xf32>
    %296 = arith.addf %294, %295 : vector<8x32xf32>
    %297 = math.tanh %296 : vector<8x32xf32>
    %298 = arith.mulf %293, %297 : vector<8x32xf32>
    %c7_i32 = arith.constant 7 : i32
    %c8_i32_117 = arith.constant 8 : i32
    %299 = arith.muli %c7_i32, %c8_i32_117 : i32
    %300 = tpu.assume_multiple %299, 8 : i32
    %301 = arith.index_cast %300 : i32 to index
    %c0_118 = arith.constant 0 : index
    %302 = vector.load %arg9[%301, %c0_118] : memref<64x128xf32, #tpu.memory_space<vmem>>, vector<8x128xf32>
    %303 = arith.truncf %298 : vector<8x32xf32> to vector<8x32xbf16>
    %c0_119 = arith.constant 0 : index
    %c0_120 = arith.constant 0 : index
    %304 = vector.load %arg2[%c0_119, %c0_120] : memref<32x128xbf16, #tpu.memory_space<vmem>>, vector<32x128xbf16>
    %cst_121 = arith.constant dense<0.000000e+00> : vector<8x128xf32>
    %305 = tpu.matmul %303, %304, %cst_121 {dimension_numbers = #tpu.dot_dimension_numbers<[1], [0], [0], [1], [0, 0, 1, 1], [], []>} : vector<8x32xbf16>, vector<32x128xbf16>, vector<8x128xf32> -> vector<8x128xf32>
    %306 = arith.addf %302, %305 : vector<8x128xf32>
    %307 = vector.extract_strided_slice %306 {offsets = [0, 0], sizes = [8, 32], strides = [1, 1]} : vector<8x128xf32> to vector<8x32xf32>
    %308 = arith.negf %307 : vector<8x32xf32>
    %309 = math.exp %308 : vector<8x32xf32>
    %cst_122 = arith.constant 1.000000e+00 : f32
    %310 = vector.broadcast %cst_122 : f32 to vector<8x32xf32>
    %311 = arith.addf %310, %309 : vector<8x32xf32>
    %312 = arith.divf %310, %311 : vector<8x32xf32>
    %313 = vector.extract_strided_slice %306 {offsets = [0, 32], sizes = [8, 32], strides = [1, 1]} : vector<8x128xf32> to vector<8x32xf32>
    %314 = arith.negf %313 : vector<8x32xf32>
    %315 = math.exp %314 : vector<8x32xf32>
    %cst_123 = arith.constant 1.000000e+00 : f32
    %316 = vector.broadcast %cst_123 : f32 to vector<8x32xf32>
    %317 = arith.addf %316, %315 : vector<8x32xf32>
    %318 = arith.divf %316, %317 : vector<8x32xf32>
    %319 = vector.extract_strided_slice %306 {offsets = [0, 64], sizes = [8, 32], strides = [1, 1]} : vector<8x128xf32> to vector<8x32xf32>
    %320 = math.tanh %319 : vector<8x32xf32>
    %321 = vector.extract_strided_slice %306 {offsets = [0, 96], sizes = [8, 32], strides = [1, 1]} : vector<8x128xf32> to vector<8x32xf32>
    %322 = arith.negf %321 : vector<8x32xf32>
    %323 = math.exp %322 : vector<8x32xf32>
    %cst_124 = arith.constant 1.000000e+00 : f32
    %324 = vector.broadcast %cst_124 : f32 to vector<8x32xf32>
    %325 = arith.addf %324, %323 : vector<8x32xf32>
    %326 = arith.divf %324, %325 : vector<8x32xf32>
    %327 = arith.mulf %318, %296 : vector<8x32xf32>
    %328 = arith.mulf %312, %320 : vector<8x32xf32>
    %329 = arith.addf %327, %328 : vector<8x32xf32>
    %330 = math.tanh %329 : vector<8x32xf32>
    %331 = arith.mulf %326, %330 : vector<8x32xf32>
    %c8_i32_125 = arith.constant 8 : i32
    %332 = arith.truncf %331 : vector<8x32xf32> to vector<8x32xbf16>
    %c0_126 = arith.constant 0 : index
    %c0_127 = arith.constant 0 : index
    %333 = vector.load %arg3[%c0_126, %c0_127] : memref<32x32xbf16, #tpu.memory_space<vmem>>, vector<32x32xbf16>
    %cst_128 = arith.constant dense<0.000000e+00> : vector<8x32xf32>
    %334 = tpu.matmul %332, %333, %cst_128 {dimension_numbers = #tpu.dot_dimension_numbers<[1], [0], [0], [1], [0, 0, 1, 1], [], []>} : vector<8x32xbf16>, vector<32x32xbf16>, vector<8x32xf32> -> vector<8x32xf32>
    %335 = arith.truncf %329 : vector<8x32xf32> to vector<8x32xbf16>
    %c0_129 = arith.constant 0 : index
    %c0_130 = arith.constant 0 : index
    %336 = vector.load %arg4[%c0_129, %c0_130] : memref<32x32xbf16, #tpu.memory_space<vmem>>, vector<32x32xbf16>
    %cst_131 = arith.constant dense<0.000000e+00> : vector<8x32xf32>
    %337 = tpu.matmul %335, %336, %cst_131 {dimension_numbers = #tpu.dot_dimension_numbers<[1], [0], [0], [1], [0, 0, 1, 1], [], []>} : vector<8x32xbf16>, vector<32x32xbf16>, vector<8x32xf32> -> vector<8x32xf32>
    %338 = arith.addf %334, %337 : vector<8x32xf32>
    %c0_132 = arith.constant 0 : index
    %c0_133 = arith.constant 0 : index
    %339 = vector.load %arg5[%c0_132, %c0_133] : memref<1x32xf32, #tpu.memory_space<vmem>>, vector<1x32xf32>
    %340 = vector.broadcast %339 : vector<1x32xf32> to vector<8x32xf32>
    %341 = arith.addf %338, %340 : vector<8x32xf32>
    %cst_134 = arith.constant 0.000000e+00 : f32
    %342 = vector.broadcast %cst_134 : f32 to vector<8x32xf32>
    %343 = arith.maximumf %341, %342 : vector<8x32xf32>
    %344 = arith.truncf %343 : vector<8x32xf32> to vector<8x32xbf16>
    %c0_135 = arith.constant 0 : index
    %c0_136 = arith.constant 0 : index
    %345 = vector.load %arg6[%c0_135, %c0_136] : memref<32x128xbf16, #tpu.memory_space<vmem>>, vector<32x128xbf16>
    %cst_137 = arith.constant dense<0.000000e+00> : vector<8x128xf32>
    %346 = tpu.matmul %344, %345, %cst_137 {dimension_numbers = #tpu.dot_dimension_numbers<[1], [0], [0], [1], [0, 0, 1, 1], [], []>} : vector<8x32xbf16>, vector<32x128xbf16>, vector<8x128xf32> -> vector<8x128xf32>
    %c0_138 = arith.constant 0 : index
    %c0_139 = arith.constant 0 : index
    %347 = vector.load %arg7[%c0_138, %c0_139] : memref<1x128xf32, #tpu.memory_space<vmem>>, vector<1x128xf32>
    %348 = vector.broadcast %347 : vector<1x128xf32> to vector<8x128xf32>
    %349 = arith.addf %346, %348 : vector<8x128xf32>
    %c0_140 = arith.constant 0 : index
    %c0_141 = arith.constant 0 : index
    %350 = vector.load %arg8[%c0_140, %c0_141] : memref<8x128xf32, #tpu.memory_space<vmem>>, vector<8x128xf32>
    tpu.vector_store %arg8[%c0_140, %c0_141], %349 {strides = array<i32>} : memref<8x128xf32, #tpu.memory_space<vmem>>, vector<8x128xf32>,
    return
  }
}

</mosaic_0001>

<llo_original>
// kernel: lstm_classifier_forward.1
$region0: #{lstm_classifier_forward.1}
  #allocation0 [shape = 'u32[]', space=smem, size = 0x4, offset = 0x4, fixed_abs, tag = 'smem constant byte address 0x4 - core index']
  #allocation1 [shape = 'u32[144,128]{1,0:T(1,128)}', space=vmem, size = 0x12000, scoped, tag = 'internal scratch']
  #allocation2 [shape = 'f32[64,128]{1,0:T(8,128)}', space=vmem, size = 0x8000, scoped, tag = 'scratch operand']
  %s0 = inlined_call_operand.vmem [shape: s32[2,8], index: 0, kind: input, shape index: {}]
  %s1 = inlined_call_operand.vmem [shape: f32[50,128], index: 1, kind: input, shape index: {}]
  %s2 = inlined_call_operand.vmem [shape: bf16[32,128], index: 2, kind: input, shape index: {}]
  %s3 = inlined_call_operand.vmem [shape: bf16[32,32], index: 3, kind: input, shape index: {}]
  %s4 = inlined_call_operand.vmem [shape: bf16[32,32], index: 4, kind: input, shape index: {}]
  %s5 = inlined_call_operand.vmem [shape: f32[1,32], index: 5, kind: input, shape index: {}]
  %s6 = inlined_call_operand.vmem [shape: bf16[32,128], index: 6, kind: input, shape index: {}]
  %s7 = inlined_call_operand.vmem [shape: f32[1,128], index: 7, kind: input, shape index: {}]
  %s8 = inlined_call_operand.vmem [shape: f32[8,128], index: 8, kind: output, shape index: {}]
  %s9 = sld [smem:[#allocation0]]
  $region46: #{lstm_classifier_forward.1} parent=0
    _
  %s11 = ssub.s32 1, %s9
  %s12 = scalar_select 0, %s11, %s9
  $region1: #{lstm_classifier_forward.1} parent=0
    #allocation3 [shape = 'u8[1024]{0}', space=smem, size = 0x400, scoped, tag = 'input window, operand 0, single buffered']
    #allocation4 [shape = 's32[1]{0}', space=sflag, size = 0x4, scoped, tag = 'scoped memory for lstm_classifier_forward.1']
    %13 = vsyncpa [#allocation4], 0
    // Predicated region
    $region2: #{lstm_classifier_forward.1} parent=1 // pred_check
      _
    $region3: #{lstm_classifier_forward.1} parent=1 // pred_check_branch
      %15 = sbr.rel (0) target = $region5
    $region4: #{lstm_classifier_forward.1} parent=1 // pred_region
      %s17 = ssub.s32 32, 32
      %18 = vsyncadd [#allocation4], %s17
      %s20 = sshll.u32 %s0, 4
      %s21 = int_to_ptr.vmem [resolvable:$true] %s20
      %23 = dma.vmem_to_smem %s21, 32, [#allocation3], [#allocation4]
    $region5: #{lstm_classifier_forward.1} parent=1 // pred_fallthru
      _
    // Predicated region
    $region6: #{lstm_classifier_forward.1} parent=1 // pred_check
      _
    $region7: #{lstm_classifier_forward.1} parent=1 // pred_check_branch
      %25 = sbr.rel (0) target = $region9
    $region8: #{lstm_classifier_forward.1} parent=1 // pred_region
      _
    $region9: #{lstm_classifier_forward.1} parent=1 // pred_fallthru
      _
    // Predicated region
    $region10: #{lstm_classifier_forward.1} parent=1 // pred_check
      _
    $region11: #{lstm_classifier_forward.1} parent=1 // pred_check_branch
      %27 = sbr.rel (0) target = $region13
    $region12: #{lstm_classifier_forward.1} parent=1 // pred_region
      _
    $region13: #{lstm_classifier_forward.1} parent=1 // pred_fallthru
      _
    // Predicated region
    $region14: #{lstm_classifier_forward.1} parent=1 // pred_check
      _
    $region15: #{lstm_classifier_forward.1} parent=1 // pred_check_branch
      %29 = sbr.rel (0) target = $region17
    $region16: #{lstm_classifier_forward.1} parent=1 // pred_region
      _
    $region17: #{lstm_classifier_forward.1} parent=1 // pred_fallthru
      _
    // Predicated region
    $region18: #{lstm_classifier_forward.1} parent=1 // pred_check
      _
    $region19: #{lstm_classifier_forward.1} parent=1 // pred_check_branch
      %31 = sbr.rel (0) target = $region21
    $region20: #{lstm_classifier_forward.1} parent=1 // pred_region
      _
    $region21: #{lstm_classifier_forward.1} parent=1 // pred_fallthru
      _
    // Predicated region
    $region22: #{lstm_classifier_forward.1} parent=1 // pred_check
      _
    $region23: #{lstm_classifier_forward.1} parent=1 // pred_check_branch
      %33 = sbr.rel (0) target = $region25
    $region24: #{lstm_classifier_forward.1} parent=1 // pred_region
      _
    $region25: #{lstm_classifier_forward.1} parent=1 // pred_fallthru
      _
    // Predicated region
    $region26: #{lstm_classifier_forward.1} parent=1 // pred_check
      _
    $region27: #{lstm_classifier_forward.1} parent=1 // pred_check_branch
      %35 = sbr.rel (0) target = $region29
    $region28: #{lstm_classifier_forward.1} parent=1 // pred_region
      _
    $region29: #{lstm_classifier_forward.1} parent=1 // pred_fallthru
      _
    // Predicated region
    $region30: #{lstm_classifier_forward.1} parent=1 // pred_check
      _
    $region31: #{lstm_classifier_forward.1} parent=1 // pred_check_branch
      %37 = sbr.rel (0) target = $region33
    $region32: #{lstm_classifier_forward.1} parent=1 // pred_region
      _
    $region33: #{lstm_classifier_forward.1} parent=1 // pred_fallthru
      _
    // Predicated region
    $region34: #{lstm_classifier_forward.1} parent=1 // pred_check
      _
    $region35: #{lstm_classifier_forward.1} parent=1 // pred_check_branch
      %39 = sbr.rel (0) target = $region37
    $region36: #{lstm_classifier_forward.1} parent=1 // pred_region
      %40 = dma.done [#allocation4], 32
    $region37: #{lstm_classifier_forward.1} parent=1 // pred_fallthru
      _
    %41 = sfence
    %43 = vst [vmem:[#allocation2] sm:$0xff] 0.0
    %44 = vst [vmem:[#allocation2 + $0x8] sm:$0xff] 0.0
    %45 = vst [vmem:[#allocation2 + $0x10] sm:$0xff] 0.0
    %46 = vst [vmem:[#allocation2 + $0x18] sm:$0xff] 0.0
    %47 = vst [vmem:[#allocation2 + $0x20] sm:$0xff] 0.0
    %48 = vst [vmem:[#allocation2 + $0x28] sm:$0xff] 0.0
    %49 = vst [vmem:[#allocation2 + $0x30] sm:$0xff] 0.0
    %50 = vst [vmem:[#allocation2 + $0x38] sm:$0xff] 0.0
    %s51 = sld [smem:[#allocation3]]
    %s52 = scalar_lea.vmem %s1, %s51
    %v53 = vld [vmem:[%s52] sm:$0x1]
    %54 = vst [vmem:[#allocation2] sm:$0x1] %v53
    %s55 = sld [smem:[#allocation3 + $0x80]]
    %s56 = scalar_lea.vmem %s1, %s55
    %v57 = vld [vmem:[%s56] sm:$0x1]
    %58 = vst [vmem:[#allocation2 + $0x1] sm:$0x1] %v57
    %s59 = sld [smem:[#allocation3 + $0x1]]
    %s60 = scalar_lea.vmem %s1, %s59
    %v61 = vld [vmem:[%s60] sm:$0x1]
    %62 = vst [vmem:[#allocation2 + $0x8] sm:$0x1] %v61
    %s63 = sld [smem:[#allocation3 + $0x81]]
    %s64 = scalar_lea.vmem %s1, %s63
    %v65 = vld [vmem:[%s64] sm:$0x1]
    %66 = vst [vmem:[#allocation2 + $0x9] sm:$0x1] %v65
    %s67 = sld [smem:[#allocation3 + $0x2]]
    %s68 = scalar_lea.vmem %s1, %s67
    %v69 = vld [vmem:[%s68] sm:$0x1]
    %70 = vst [vmem:[#allocation2 + $0x10] sm:$0x1] %v69
    %s71 = sld [smem:[#allocation3 + $0x82]]
    %s72 = scalar_lea.vmem %s1, %s71
    %v73 = vld [vmem:[%s72] sm:$0x1]
    %74 = vst [vmem:[#allocation2 + $0x11] sm:$0x1] %v73
    %s75 = sld [smem:[#allocation3 + $0x3]]
    %s76 = scalar_lea.vmem %s1, %s75
    %v77 = vld [vmem:[%s76] sm:$0x1]
    %78 = vst [vmem:[#allocation2 + $0x18] sm:$0x1] %v77
    %s79 = sld [smem:[#allocation3 + $0x83]]
    %s80 = scalar_lea.vmem %s1, %s79
    %v81 = vld [vmem:[%s80] sm:$0x1]
    %82 = vst [vmem:[#allocation2 + $0x19] sm:$0x1] %v81
    %s83 = sld [smem:[#allocation3 + $0x4]]
    %s84 = scalar_lea.vmem %s1, %s83
    %v85 = vld [vmem:[%s84] sm:$0x1]
    %86 = vst [vmem:[#allocation2 + $0x20] sm:$0x1] %v85
    %s87 = sld [smem:[#allocation3 + $0x84]]
    %s88 = scalar_lea.vmem %s1, %s87
    %v89 = vld [vmem:[%s88] sm:$0x1]
    %90 = vst [vmem:[#allocation2 + $0x21] sm:$0x1] %v89
    %s91 = sld [smem:[#allocation3 + $0x5]]
    %s92 = scalar_lea.vmem %s1, %s91
    %v93 = vld [vmem:[%s92] sm:$0x1]
    %94 = vst [vmem:[#allocation2 + $0x28] sm:$0x1] %v93
    %s95 = sld [smem:[#allocation3 + $0x85]]
    %s96 = scalar_lea.vmem %s1, %s95
    %v97 = vld [vmem:[%s96] sm:$0x1]
    %98 = vst [vmem:[#allocation2 + $0x29] sm:$0x1] %v97
    %s99 = sld [smem:[#allocation3 + $0x6]]
    %s100 = scalar_lea.vmem %s1, %s99
    %v101 = vld [vmem:[%s100] sm:$0x1]
    %102 = vst [vmem:[#allocation2 + $0x30] sm:$0x1] %v101
    %s103 = sld [smem:[#allocation3 + $0x86]]
    %s104 = scalar_lea.vmem %s1, %s103
    %v105 = vld [vmem:[%s104] sm:$0x1]
    %106 = vst [vmem:[#allocation2 + $0x31] sm:$0x1] %v105
    %s107 = sld [smem:[#allocation3 + $0x7]]
    %s108 = scalar_lea.vmem %s1, %s107
    %v109 = vld [vmem:[%s108] sm:$0x1]
    %110 = vst [vmem:[#allocation2 + $0x38] sm:$0x1] %v109
    %s111 = sld [smem:[#allocation3 + $0x87]]
    %s112 = scalar_lea.vmem %s1, %s111
    %v113 = vld [vmem:[%s112] sm:$0x1]
    %114 = vst [vmem:[#allocation2 + $0x39] sm:$0x1] %v113
    %v115 = vld [vmem:[#allocation2] sm:$0xff]
    %v116 = vld [vmem:[%s2] sm:$0xf]
    %v117 = vld [vmem:[%s2 + $0x4] sm:$0xf]
    %v118 = vld [vmem:[%s2 + $0x8] sm:$0xf]
    %v119 = vld [vmem:[%s2 + $0xc] sm:$0xf]
    %v124 = vunpack.c.l.b16 %v116
    %v125 = vunpack.c.l.b16 %v117
    %v126 = vunpack.c.l.b16 %v118
    %v127 = vunpack.c.l.b16 %v119
    %v128 = vpack.c.b16 %v125, %v124
    %v129 = vpack.c.b16 %v127, %v126
    %vm132 = vcmask 261120
    %v134 = vsel %vm132, 0, 0
    %136 = vmatprep.subr.bf16.mxu0 0
    %137 = vmatpush1.bf16.msra.mxu0 %v128
    %138 = vmatprep.subr.bf16.mxu0 0
    %139 = vmatpush1.bf16.msra.mxu0 %v129
    %140 = vmatprep.subr.bf16.mxu0 0
    %141 = vmatpush1.bf16.msra.mxu0 0
    %142 = vmatprep.subr.bf16.mxu0 0
    %143 = vmatpush1.bf16.msra.mxu0 0
    %144 = vmatprep.subr.bf16.mxu0 0
    %145 = vmatpush1.bf16.msra.mxu0 0
    %146 = vmatprep.subr.bf16.mxu0 0
    %147 = vmatpush1.bf16.msra.mxu0 0
    %148 = vmatprep.subr.bf16.mxu0 0
    %149 = vmatpush1.bf16.msra.mxu0 0
    %150 = vmatprep.subr.bf16.mxu0 0
    %151 = vmatpush1.bf16.msra.mxu0 0
    %152 = vmatprep.subr.bf16.mxu0 0
    %153 = vmatpush1.bf16.msra.mxu0 0
    %154 = vmatprep.subr.bf16.mxu0 0
    %155 = vmatpush1.bf16.msra.mxu0 0
    %156 = vmatprep.subr.bf16.mxu0 0
    %157 = vmatpush1.bf16.msra.mxu0 0
    %158 = vmatprep.subr.bf16.mxu0 0
    %159 = vmatpush1.bf16.msra.mxu0 0
    %160 = vmatprep.subr.bf16.mxu0 0
    %161 = vmatpush1.bf16.msra.mxu0 0
    %162 = vmatprep.subr.bf16.mxu0 0
    %163 = vmatpush1.bf16.msra.mxu0 0
    %164 = vmatprep.subr.bf16.mxu0 0
    %165 = vmatpush1.bf16.msra.mxu0 0
    %166 = vmatprep.subr.bf16.mxu0 0
    %167 = vmatpush1.bf16.msra.mxu0 0
    %168 = vmatprep.mubr.bf16.mxu0 0
    %169 = vmatmul.mubr.bf16.gmra.mrb[0].mxu0 %v134
    %v170 = vpop.f32.mrb[0].mxu0
    %v171 = vadd.f32 0.0, %v170
    %v172 = vpop.f32.mrb[0].mxu0
    %v173 = vpop.f32.mrb[0].mxu0
    %v174 = vpop.f32.mrb[0].mxu0
    %175 = vdwg.mxu0
    %v176 = vadd.f32 %v115, %v171
    %v177 = vxor.u32 %v176, 2147483648
    %v178 = vmul.f32 %v177, 1.442695
    %v179 = vpow.pop %v178
    %v180 = vadd.f32 %v179, 1.0
    %v181 = vrcp.pop %v180
    %v182 = vmul.f32 1.0, %v181
    %v183 = vtanh.pop %v176
    %v184 = vmul.f32 %v182, 0.0
    %186 = vrot.lane.b32.xlu0 %v183, 64
    %v187 = vpop.permute.xlu0 %186
    %v189 = vmul.f32 %v182, %v187
    %191 = vrot.lane.b32.xlu0 %v189, 32
    %v192 = vpop.permute.xlu0 %191
    %v194 = vadd.f32 %v184, %v192
    %v195 = vtanh.pop %v194
    %197 = vrot.lane.b32.xlu0 %v195, 64
    %v198 = vpop.permute.xlu0 %197
    %v200 = vmul.f32 %v182, %v198
    %s201 = scalar_lea.vmem [#allocation2], 8
    %v202 = vld [vmem:[%s201] sm:$0xff]
    %v203 = vpack.c.bf16 %v200, %v200
    %205 = vrot.lane.b32.xlu0 %v203, 32
    %v206 = vpop.permute.xlu0 %205
    %v208 = vsel %vm132, %v206, 0
    %210 = vmatprep.subr.bf16.mxu0 0
    %211 = vmatpush1.bf16.msra.mxu0 %v128
    %212 = vmatprep.subr.bf16.mxu0 0
    %213 = vmatpush1.bf16.msra.mxu0 %v129
    %214 = vmatprep.subr.bf16.mxu0 0
    %215 = vmatpush1.bf16.msra.mxu0 0
    %216 = vmatprep.subr.bf16.mxu0 0
    %217 = vmatpush1.bf16.msra.mxu0 0
    %218 = vmatprep.subr.bf16.mxu0 0
    %219 = vmatpush1.bf16.msra.mxu0 0
    %220 = vmatprep.subr.bf16.mxu0 0
    %221 = vmatpush1.bf16.msra.mxu0 0
    %222 = vmatprep.subr.bf16.mxu0 0
    %223 = vmatpush1.bf16.msra.mxu0 0
    %224 = vmatprep.subr.bf16.mxu0 0
    %225 = vmatpush1.bf16.msra.mxu0 0
    %226 = vmatprep.subr.bf16.mxu0 0
    %227 = vmatpush1.bf16.msra.mxu0 0
    %228 = vmatprep.subr.bf16.mxu0 0
    %229 = vmatpush1.bf16.msra.mxu0 0
    %230 = vmatprep.subr.bf16.mxu0 0
    %231 = vmatpush1.bf16.msra.mxu0 0
    %232 = vmatprep.subr.bf16.mxu0 0
    %233 = vmatpush1.bf16.msra.mxu0 0
    %234 = vmatprep.subr.bf16.mxu0 0
    %235 = vmatpush1.bf16.msra.mxu0 0
    %236 = vmatprep.subr.bf16.mxu0 0
    %237 = vmatpush1.bf16.msra.mxu0 0
    %238 = vmatprep.subr.bf16.mxu0 0
    %239 = vmatpush1.bf16.msra.mxu0 0
    %240 = vmatprep.subr.bf16.mxu0 0
    %241 = vmatpush1.bf16.msra.mxu0 0
    %242 = vmatprep.mubr.bf16.mxu0 0
    %243 = vmatmul.mubr.bf16.gmra.mrb[0].mxu0 %v208
    %v244 = vpop.f32.mrb[0].mxu0
    %v245 = vadd.f32 0.0, %v244
    %v246 = vpop.f32.mrb[0].mxu0
    %v247 = vpop.f32.mrb[0].mxu0
    %v248 = vpop.f32.mrb[0].mxu0
    %249 = vdwg.mxu0
    %v250 = vadd.f32 %v202, %v245
    %v251 = vxor.u32 %v250, 2147483648
    %v252 = vmul.f32 %v251, 1.442695
    %v253 = vpow.pop %v252
    %v254 = vadd.f32 %v253, 1.0
    %v255 = vrcp.pop %v254
    %v256 = vmul.f32 1.0, %v255
    %v257 = vtanh.pop %v250
    %v258 = vmul.f32 %v256, %v194
    %260 = vrot.lane.b32.xlu0 %v257, 64
    %v261 = vpop.permute.xlu0 %260
    %v263 = vmul.f32 %v256, %v261
    %265 = vrot.lane.b32.xlu0 %v263, 32
    %v266 = vpop.permute.xlu0 %265
    %v268 = vadd.f32 %v258, %v266
    %v269 = vtanh.pop %v268
    %271 = vrot.lane.b32.xlu0 %v269, 64
    %v272 = vpop.permute.xlu0 %271
    %v274 = vmul.f32 %v256, %v272
    %s275 = scalar_lea.vmem [#allocation2], 16
    %v276 = vld [vmem:[%s275] sm:$0xff]
    %v277 = vpack.c.bf16 %v274, %v274
    %279 = vrot.lane.b32.xlu0 %v277, 32
    %v280 = vpop.permute.xlu0 %279
    %v282 = vsel %vm132, %v280, 0
    %284 = vmatprep.subr.bf16.mxu0 0
    %285 = vmatpush1.bf16.msra.mxu0 %v128
    %286 = vmatprep.subr.bf16.mxu0 0
    %287 = vmatpush1.bf16.msra.mxu0 %v129
    %288 = vmatprep.subr.bf16.mxu0 0
    %289 = vmatpush1.bf16.msra.mxu0 0
    %290 = vmatprep.subr.bf16.mxu0 0
    %291 = vmatpush1.bf16.msra.mxu0 0
    %292 = vmatprep.subr.bf16.mxu0 0
    %293 = vmatpush1.bf16.msra.mxu0 0
    %294 = vmatprep.subr.bf16.mxu0 0
    %295 = vmatpush1.bf16.msra.mxu0 0
    %296 = vmatprep.subr.bf16.mxu0 0
    %297 = vmatpush1.bf16.msra.mxu0 0
    %298 = vmatprep.subr.bf16.mxu0 0
    %299 = vmatpush1.bf16.msra.mxu0 0
    %300 = vmatprep.subr.bf16.mxu0 0
    %301 = vmatpush1.bf16.msra.mxu0 0
    %302 = vmatprep.subr.bf16.mxu0 0
    %303 = vmatpush1.bf16.msra.mxu0 0
    %304 = vmatprep.subr.bf16.mxu0 0
    %305 = vmatpush1.bf16.msra.mxu0 0
    %306 = vmatprep.subr.bf16.mxu0 0
    %307 = vmatpush1.bf16.msra.mxu0 0
    %308 = vmatprep.subr.bf16.mxu0 0
    %309 = vmatpush1.bf16.msra.mxu0 0
    %310 = vmatprep.subr.bf16.mxu0 0
    %311 = vmatpush1.bf16.msra.mxu0 0
    %312 = vmatprep.subr.bf16.mxu0 0
    %313 = vmatpush1.bf16.msra.mxu0 0
    %314 = vmatprep.subr.bf16.mxu0 0
    %315 = vmatpush1.bf16.msra.mxu0 0
    %316 = vmatprep.mubr.bf16.mxu0 0
    %317 = vmatmul.mubr.bf16.gmra.mrb[0].mxu0 %v282
    %v318 = vpop.f32.mrb[0].mxu0
    %v319 = vadd.f32 0.0, %v318
    %v320 = vpop.f32.mrb[0].mxu0
    %v321 = vpop.f32.mrb[0].mxu0
    %v322 = vpop.f32.mrb[0].mxu0
    %323 = vdwg.mxu0
    %v324 = vadd.f32 %v276, %v319
    %v325 = vxor.u32 %v324, 2147483648
    %v326 = vmul.f32 %v325, 1.442695
    %v327 = vpow.pop %v326
    %v328 = vadd.f32 %v327, 1.0
    %v329 = vrcp.pop %v328
    %v330 = vmul.f32 1.0, %v329
    %v331 = vtanh.pop %v324
    %v332 = vmul.f32 %v330, %v268
    %334 = vrot.lane.b32.xlu0 %v331, 64
    %v335 = vpop.permute.xlu0 %334
    %v337 = vmul.f32 %v330, %v335
    %339 = vrot.lane.b32.xlu0 %v337, 32
    %v340 = vpop.permute.xlu0 %339
    %v342 = vadd.f32 %v332, %v340
    %v343 = vtanh.pop %v342
    %345 = vrot.lane.b32.xlu0 %v343, 64
    %v346 = vpop.permute.xlu0 %345
    %v348 = vmul.f32 %v330, %v346
    %s349 = scalar_lea.vmem [#allocation2], 24
    %v350 = vld [vmem:[%s349] sm:$0xff]
    %v351 = vpack.c.bf16 %v348, %v348
    %353 = vrot.lane.b32.xlu0 %v351, 32
    %v354 = vpop.permute.xlu0 %353
    %v356 = vsel %vm132, %v354, 0
    %358 = vmatprep.subr.bf16.mxu0 0
    %359 = vmatpush1.bf16.msra.mxu0 %v128
    %360 = vmatprep.subr.bf16.mxu0 0
    %361 = vmatpush1.bf16.msra.mxu0 %v129
    %362 = vmatprep.subr.bf16.mxu0 0
    %363 = vmatpush1.bf16.msra.mxu0 0
    %364 = vmatprep.subr.bf16.mxu0 0
    %365 = vmatpush1.bf16.msra.mxu0 0
    %366 = vmatprep.subr.bf16.mxu0 0
    %367 = vmatpush1.bf16.msra.mxu0 0
    %368 = vmatprep.subr.bf16.mxu0 0
    %369 = vmatpush1.bf16.msra.mxu0 0
    %370 = vmatprep.subr.bf16.mxu0 0
    %371 = vmatpush1.bf16.msra.mxu0 0
    %372 = vmatprep.subr.bf16.mxu0 0
    %373 = vmatpush1.bf16.msra.mxu0 0
    %374 = vmatprep.subr.bf16.mxu0 0
    %375 = vmatpush1.bf16.msra.mxu0 0
    %376 = vmatprep.subr.bf16.mxu0 0
    %377 = vmatpush1.bf16.msra.mxu0 0
    %378 = vmatprep.subr.bf16.mxu0 0
    %379 = vmatpush1.bf16.msra.mxu0 0
    %380 = vmatprep.subr.bf16.mxu0 0
    %381 = vmatpush1.bf16.msra.mxu0 0
    %382 = vmatprep.subr.bf16.mxu0 0
    %383 = vmatpush1.bf16.msra.mxu0 0
    %384 = vmatprep.subr.bf16.mxu0 0
    %385 = vmatpush1.bf16.msra.mxu0 0
    %386 = vmatprep.subr.bf16.mxu0 0
    %387 = vmatpush1.bf16.msra.mxu0 0
    %388 = vmatprep.subr.bf16.mxu0 0
    %389 = vmatpush1.bf16.msra.mxu0 0
    %390 = vmatprep.mubr.bf16.mxu0 0
    %391 = vmatmul.mubr.bf16.gmra.mrb[0].mxu0 %v356
    %v392 = vpop.f32.mrb[0].mxu0
    %v393 = vadd.f32 0.0, %v392
    %v394 = vpop.f32.mrb[0].mxu0
    %v395 = vpop.f32.mrb[0].mxu0
    %v396 = vpop.f32.mrb[0].mxu0
    %397 = vdwg.mxu0
    %v398 = vadd.f32 %v350, %v393
    %v399 = vxor.u32 %v398, 2147483648
    %v400 = vmul.f32 %v399, 1.442695
    %v401 = vpow.pop %v400
    %v402 = vadd.f32 %v401, 1.0
    %v403 = vrcp.pop %v402
    %v404 = vmul.f32 1.0, %v403
    %v405 = vtanh.pop %v398
    %v406 = vmul.f32 %v404, %v342
    %408 = vrot.lane.b32.xlu0 %v405, 64
    %v409 = vpop.permute.xlu0 %408
    %v411 = vmul.f32 %v404, %v409
    %413 = vrot.lane.b32.xlu0 %v411, 32
    %v414 = vpop.permute.xlu0 %413
    %v416 = vadd.f32 %v406, %v414
    %v417 = vtanh.pop %v416
    %419 = vrot.lane.b32.xlu0 %v417, 64
    %v420 = vpop.permute.xlu0 %419
    %v422 = vmul.f32 %v404, %v420
    %s423 = scalar_lea.vmem [#allocation2], 32
    %v424 = vld [vmem:[%s423] sm:$0xff]
    %v425 = vpack.c.bf16 %v422, %v422
    %427 = vrot.lane.b32.xlu0 %v425, 32
    %v428 = vpop.permute.xlu0 %427
    %v430 = vsel %vm132, %v428, 0
    %432 = vmatprep.subr.bf16.mxu0 0
    %433 = vmatpush1.bf16.msra.mxu0 %v128
    %434 = vmatprep.subr.bf16.mxu0 0
    %435 = vmatpush1.bf16.msra.mxu0 %v129
    %436 = vmatprep.subr.bf16.mxu0 0
    %437 = vmatpush1.bf16.msra.mxu0 0
    %438 = vmatprep.subr.bf16.mxu0 0
    %439 = vmatpush1.bf16.msra.mxu0 0
    %440 = vmatprep.subr.bf16.mxu0 0
    %441 = vmatpush1.bf16.msra.mxu0 0
    %442 = vmatprep.subr.bf16.mxu0 0
    %443 = vmatpush1.bf16.msra.mxu0 0
    %444 = vmatprep.subr.bf16.mxu0 0
    %445 = vmatpush1.bf16.msra.mxu0 0
    %446 = vmatprep.subr.bf16.mxu0 0
    %447 = vmatpush1.bf16.msra.mxu0 0
    %448 = vmatprep.subr.bf16.mxu0 0
    %449 = vmatpush1.bf16.msra.mxu0 0
    %450 = vmatprep.subr.bf16.mxu0 0
    %451 = vmatpush1.bf16.msra.mxu0 0
    %452 = vmatprep.subr.bf16.mxu0 0
    %453 = vmatpush1.bf16.msra.mxu0 0
    %454 = vmatprep.subr.bf16.mxu0 0
    %455 = vmatpush1.bf16.msra.mxu0 0
    %456 = vmatprep.subr.bf16.mxu0 0
    %457 = vmatpush1.bf16.msra.mxu0 0
    %458 = vmatprep.subr.bf16.mxu0 0
    %459 = vmatpush1.bf16.msra.mxu0 0
    %460 = vmatprep.subr.bf16.mxu0 0
    %461 = vmatpush1.bf16.msra.mxu0 0
    %462 = vmatprep.subr.bf16.mxu0 0
    %463 = vmatpush1.bf16.msra.mxu0 0
    %464 = vmatprep.mubr.bf16.mxu0 0
    %465 = vmatmul.mubr.bf16.gmra.mrb[0].mxu0 %v430
    %v466 = vpop.f32.mrb[0].mxu0
    %v467 = vadd.f32 0.0, %v466
    %v468 = vpop.f32.mrb[0].mxu0
    %v469 = vpop.f32.mrb[0].mxu0
    %v470 = vpop.f32.mrb[0].mxu0
    %471 = vdwg.mxu0
    %v472 = vadd.f32 %v424, %v467
    %v473 = vxor.u32 %v472, 2147483648
    %v474 = vmul.f32 %v473, 1.442695
    %v475 = vpow.pop %v474
    %v476 = vadd.f32 %v475, 1.0
    %v477 = vrcp.pop %v476
    %v478 = vmul.f32 1.0, %v477
    %v479 = vtanh.pop %v472
    %v480 = vmul.f32 %v478, %v416
    %482 = vrot.lane.b32.xlu0 %v479, 64
    %v483 = vpop.permute.xlu0 %482
    %v485 = vmul.f32 %v478, %v483
    %487 = vrot.lane.b32.xlu0 %v485, 32
    %v488 = vpop.permute.xlu0 %487
    %v490 = vadd.f32 %v480, %v488
    %v491 = vtanh.pop %v490
    %493 = vrot.lane.b32.xlu0 %v491, 64
    %v494 = vpop.permute.xlu0 %493
    %v496 = vmul.f32 %v478, %v494
    %s497 = scalar_lea.vmem [#allocation2], 40
    %v498 = vld [vmem:[%s497] sm:$0xff]
    %v499 = vpack.c.bf16 %v496, %v496
    %501 = vrot.lane.b32.xlu0 %v499, 32
    %v502 = vpop.permute.xlu0 %501
    %v504 = vsel %vm132, %v502, 0
    %506 = vmatprep.subr.bf16.mxu0 0
    %507 = vmatpush1.bf16.msra.mxu0 %v128
    %508 = vmatprep.subr.bf16.mxu0 0
    %509 = vmatpush1.bf16.msra.mxu0 %v129
    %510 = vmatprep.subr.bf16.mxu0 0
    %511 = vmatpush1.bf16.msra.mxu0 0
    %512 = vmatprep.subr.bf16.mxu0 0
    %513 = vmatpush1.bf16.msra.mxu0 0
    %514 = vmatprep.subr.bf16.mxu0 0
    %515 = vmatpush1.bf16.msra.mxu0 0
    %516 = vmatprep.subr.bf16.mxu0 0
    %517 = vmatpush1.bf16.msra.mxu0 0
    %518 = vmatprep.subr.bf16.mxu0 0
    %519 = vmatpush1.bf16.msra.mxu0 0
    %520 = vmatprep.subr.bf16.mxu0 0
    %521 = vmatpush1.bf16.msra.mxu0 0
    %522 = vmatprep.subr.bf16.mxu0 0
    %523 = vmatpush1.bf16.msra.mxu0 0
    %524 = vmatprep.subr.bf16.mxu0 0
    %525 = vmatpush1.bf16.msra.mxu0 0
    %526 = vmatprep.subr.bf16.mxu0 0
    %527 = vmatpush1.bf16.msra.mxu0 0
    %528 = vmatprep.subr.bf16.mxu0 0
    %529 = vmatpush1.bf16.msra.mxu0 0
    %530 = vmatprep.subr.bf16.mxu0 0
    %531 = vmatpush1.bf16.msra.mxu0 0
    %532 = vmatprep.subr.bf16.mxu0 0
    %533 = vmatpush1.bf16.msra.mxu0 0
    %534 = vmatprep.subr.bf16.mxu0 0
    %535 = vmatpush1.bf16.msra.mxu0 0
    %536 = vmatprep.subr.bf16.mxu0 0
    %537 = vmatpush1.bf16.msra.mxu0 0
    %538 = vmatprep.mubr.bf16.mxu0 0
    %539 = vmatmul.mubr.bf16.gmra.mrb[0].mxu0 %v504
    %v540 = vpop.f32.mrb[0].mxu0
    %v541 = vadd.f32 0.0, %v540
    %v542 = vpop.f32.mrb[0].mxu0
    %v543 = vpop.f32.mrb[0].mxu0
    %v544 = vpop.f32.mrb[0].mxu0
    %545 = vdwg.mxu0
    %v546 = vadd.f32 %v498, %v541
    %v547 = vxor.u32 %v546, 2147483648
    %v548 = vmul.f32 %v547, 1.442695
    %v549 = vpow.pop %v548
    %v550 = vadd.f32 %v549, 1.0
    %v551 = vrcp.pop %v550
    %v552 = vmul.f32 1.0, %v551
    %v553 = vtanh.pop %v546
    %v554 = vmul.f32 %v552, %v490
    %556 = vrot.lane.b32.xlu0 %v553, 64
    %v557 = vpop.permute.xlu0 %556
    %v559 = vmul.f32 %v552, %v557
    %561 = vrot.lane.b32.xlu0 %v559, 32
    %v562 = vpop.permute.xlu0 %561
    %v564 = vadd.f32 %v554, %v562
    %v565 = vtanh.pop %v564
    %567 = vrot.lane.b32.xlu0 %v565, 64
    %v568 = vpop.permute.xlu0 %567
    %v570 = vmul.f32 %v552, %v568
    %s571 = scalar_lea.vmem [#allocation2], 48
    %v572 = vld [vmem:[%s571] sm:$0xff]
    %v573 = vpack.c.bf16 %v570, %v570
    %575 = vrot.lane.b32.xlu0 %v573, 32
    %v576 = vpop.permute.xlu0 %575
    %v578 = vsel %vm132, %v576, 0
    %580 = vmatprep.subr.bf16.mxu0 0
    %581 = vmatpush1.bf16.msra.mxu0 %v128
    %582 = vmatprep.subr.bf16.mxu0 0
    %583 = vmatpush1.bf16.msra.mxu0 %v129
    %584 = vmatprep.subr.bf16.mxu0 0
    %585 = vmatpush1.bf16.msra.mxu0 0
    %586 = vmatprep.subr.bf16.mxu0 0
    %587 = vmatpush1.bf16.msra.mxu0 0
    %588 = vmatprep.subr.bf16.mxu0 0
    %589 = vmatpush1.bf16.msra.mxu0 0
    %590 = vmatprep.subr.bf16.mxu0 0
    %591 = vmatpush1.bf16.msra.mxu0 0
    %592 = vmatprep.subr.bf16.mxu0 0
    %593 = vmatpush1.bf16.msra.mxu0 0
    %594 = vmatprep.subr.bf16.mxu0 0
    %595 = vmatpush1.bf16.msra.mxu0 0
    %596 = vmatprep.subr.bf16.mxu0 0
    %597 = vmatpush1.bf16.msra.mxu0 0
    %598 = vmatprep.subr.bf16.mxu0 0
    %599 = vmatpush1.bf16.msra.mxu0 0
    %600 = vmatprep.subr.bf16.mxu0 0
    %601 = vmatpush1.bf16.msra.mxu0 0
    %602 = vmatprep.subr.bf16.mxu0 0
    %603 = vmatpush1.bf16.msra.mxu0 0
    %604 = vmatprep.subr.bf16.mxu0 0
    %605 = vmatpush1.bf16.msra.mxu0 0
    %606 = vmatprep.subr.bf16.mxu0 0
    %607 = vmatpush1.bf16.msra.mxu0 0
    %608 = vmatprep.subr.bf16.mxu0 0
    %609 = vmatpush1.bf16.msra.mxu0 0
    %610 = vmatprep.subr.bf16.mxu0 0
    %611 = vmatpush1.bf16.msra.mxu0 0
    %612 = vmatprep.mubr.bf16.mxu0 0
    %613 = vmatmul.mubr.bf16.gmra.mrb[0].mxu0 %v578
    %v614 = vpop.f32.mrb[0].mxu0
    %v615 = vadd.f32 0.0, %v614
    %v616 = vpop.f32.mrb[0].mxu0
    %v617 = vpop.f32.mrb[0].mxu0
    %v618 = vpop.f32.mrb[0].mxu0
    %619 = vdwg.mxu0
    %v620 = vadd.f32 %v572, %v615
    %v621 = vxor.u32 %v620, 2147483648
    %v622 = vmul.f32 %v621, 1.442695
    %v623 = vpow.pop %v622
    %v624 = vadd.f32 %v623, 1.0
    %v625 = vrcp.pop %v624
    %v626 = vmul.f32 1.0, %v625
    %v627 = vtanh.pop %v620
    %v628 = vmul.f32 %v626, %v564
    %630 = vrot.lane.b32.xlu0 %v627, 64
    %v631 = vpop.permute.xlu0 %630
    %v633 = vmul.f32 %v626, %v631
    %635 = vrot.lane.b32.xlu0 %v633, 32
    %v636 = vpop.permute.xlu0 %635
    %v638 = vadd.f32 %v628, %v636
    %v639 = vtanh.pop %v638
    %641 = vrot.lane.b32.xlu0 %v639, 64
    %v642 = vpop.permute.xlu0 %641
    %v644 = vmul.f32 %v626, %v642
    %s645 = scalar_lea.vmem [#allocation2], 56
    %v646 = vld [vmem:[%s645] sm:$0xff]
    %v647 = vpack.c.bf16 %v644, %v644
    %649 = vrot.lane.b32.xlu0 %v647, 32
    %v650 = vpop.permute.xlu0 %649
    %v652 = vsel %vm132, %v650, 0
    %654 = vmatprep.subr.bf16.mxu0 0
    %655 = vmatpush1.bf16.msra.mxu0 %v128
    %656 = vmatprep.subr.bf16.mxu0 0
    %657 = vmatpush1.bf16.msra.mxu0 %v129
    %658 = vmatprep.subr.bf16.mxu0 0
    %659 = vmatpush1.bf16.msra.mxu0 0
    %660 = vmatprep.subr.bf16.mxu0 0
    %661 = vmatpush1.bf16.msra.mxu0 0
    %662 = vmatprep.subr.bf16.mxu0 0
    %663 = vmatpush1.bf16.msra.mxu0 0
    %664 = vmatprep.subr.bf16.mxu0 0
    %665 = vmatpush1.bf16.msra.mxu0 0
    %666 = vmatprep.subr.bf16.mxu0 0
    %667 = vmatpush1.bf16.msra.mxu0 0
    %668 = vmatprep.subr.bf16.mxu0 0
    %669 = vmatpush1.bf16.msra.mxu0 0
    %670 = vmatprep.subr.bf16.mxu0 0
    %671 = vmatpush1.bf16.msra.mxu0 0
    %672 = vmatprep.subr.bf16.mxu0 0
    %673 = vmatpush1.bf16.msra.mxu0 0
    %674 = vmatprep.subr.bf16.mxu0 0
    %675 = vmatpush1.bf16.msra.mxu0 0
    %676 = vmatprep.subr.bf16.mxu0 0
    %677 = vmatpush1.bf16.msra.mxu0 0
    %678 = vmatprep.subr.bf16.mxu0 0
    %679 = vmatpush1.bf16.msra.mxu0 0
    %680 = vmatprep.subr.bf16.mxu0 0
    %681 = vmatpush1.bf16.msra.mxu0 0
    %682 = vmatprep.subr.bf16.mxu0 0
    %683 = vmatpush1.bf16.msra.mxu0 0
    %684 = vmatprep.subr.bf16.mxu0 0
    %685 = vmatpush1.bf16.msra.mxu0 0
    %686 = vmatprep.mubr.bf16.mxu0 0
    %687 = vmatmul.mubr.bf16.gmra.mrb[0].mxu0 %v652
    %v688 = vpop.f32.mrb[0].mxu0
    %v689 = vadd.f32 0.0, %v688
    %v690 = vpop.f32.mrb[0].mxu0
    %v691 = vpop.f32.mrb[0].mxu0
    %v692 = vpop.f32.mrb[0].mxu0
    %693 = vdwg.mxu0
    %v694 = vadd.f32 %v646, %v689
    %v695 = vxor.u32 %v694, 2147483648
    %v696 = vmul.f32 %v695, 1.442695
    %v697 = vpow.pop %v696
    %v698 = vadd.f32 %v697, 1.0
    %v699 = vrcp.pop %v698
    %v700 = vmul.f32 1.0, %v699
    %v701 = vtanh.pop %v694
    %v702 = vmul.f32 %v700, %v638
    %704 = vrot.lane.b32.xlu0 %v701, 64
    %v705 = vpop.permute.xlu0 %704
    %v707 = vmul.f32 %v700, %v705
    %709 = vrot.lane.b32.xlu0 %v707, 32
    %v710 = vpop.permute.xlu0 %709
    %v712 = vadd.f32 %v702, %v710
    %v713 = vtanh.pop %v712
    %715 = vrot.lane.b32.xlu0 %v713, 64
    %v716 = vpop.permute.xlu0 %715
    %v718 = vmul.f32 %v700, %v716
    %v719 = vpack.c.bf16 %v718, %v718
    %v720 = vld [vmem:[%s3] sm:$0xf]
    %v721 = vld [vmem:[%s3 + $0x4] sm:$0xf]
    %v722 = vld [vmem:[%s3 + $0x8] sm:$0xf]
    %v723 = vld [vmem:[%s3 + $0xc] sm:$0xf]
    %v724 = vpack.c.bf16 %v712, %v712
    %v725 = vld [vmem:[%s4] sm:$0xf]
    %v726 = vld [vmem:[%s4 + $0x4] sm:$0xf]
    %v727 = vld [vmem:[%s4 + $0x8] sm:$0xf]
    %v728 = vld [vmem:[%s4 + $0xc] sm:$0xf]
    %730 = vrot.lane.b32.xlu0 %v724, 96
    %v731 = vpop.permute.xlu0 %730
    %v736 = vunpack.c.l.b16 %v725
    %v737 = vunpack.c.l.b16 %v726
    %v738 = vunpack.c.l.b16 %v727
    %v739 = vunpack.c.l.b16 %v728
    %v740 = vpack.c.b16 %v737, %v736
    %v741 = vpack.c.b16 %v739, %v738
    %v745 = vsel %vm132, %v731, 0
    %747 = vmatprep.subr.bf16.mxu0 0
    %748 = vmatpush1.bf16.msra.mxu0 %v740
    %749 = vmatprep.subr.bf16.mxu0 0
    %750 = vmatpush1.bf16.msra.mxu0 %v741
    %751 = vmatprep.subr.bf16.mxu0 0
    %752 = vmatpush1.bf16.msra.mxu0 0
    %753 = vmatprep.subr.bf16.mxu0 0
    %754 = vmatpush1.bf16.msra.mxu0 0
    %755 = vmatprep.subr.bf16.mxu0 0
    %756 = vmatpush1.bf16.msra.mxu0 0
    %757 = vmatprep.subr.bf16.mxu0 0
    %758 = vmatpush1.bf16.msra.mxu0 0
    %759 = vmatprep.subr.bf16.mxu0 0
    %760 = vmatpush1.bf16.msra.mxu0 0
    %761 = vmatprep.subr.bf16.mxu0 0
    %762 = vmatpush1.bf16.msra.mxu0 0
    %763 = vmatprep.subr.bf16.mxu0 0
    %764 = vmatpush1.bf16.msra.mxu0 0
    %765 = vmatprep.subr.bf16.mxu0 0
    %766 = vmatpush1.bf16.msra.mxu0 0
    %767 = vmatprep.subr.bf16.mxu0 0
    %768 = vmatpush1.bf16.msra.mxu0 0
    %769 = vmatprep.subr.bf16.mxu0 0
    %770 = vmatpush1.bf16.msra.mxu0 0
    %771 = vmatprep.subr.bf16.mxu0 0
    %772 = vmatpush1.bf16.msra.mxu0 0
    %773 = vmatprep.subr.bf16.mxu0 0
    %774 = vmatpush1.bf16.msra.mxu0 0
    %775 = vmatprep.subr.bf16.mxu0 0
    %776 = vmatpush1.bf16.msra.mxu0 0
    %777 = vmatprep.subr.bf16.mxu0 0
    %778 = vmatpush1.bf16.msra.mxu0 0
    %779 = vmatprep.mubr.bf16.mxu0 0
    %780 = vmatmul.mubr.bf16.gmra.mrb[0].mxu0 %v745
    %v781 = vpop.f32.mrb[0].mxu0
    %v782 = vadd.f32 0.0, %v781
    %v783 = vpop.f32.mrb[0].mxu0
    %v784 = vpop.f32.mrb[0].mxu0
    %v785 = vpop.f32.mrb[0].mxu0
    %786 = vdwg.mxu0
    %788 = vrot.lane.b32.xlu0 %v719, 32
    %v789 = vpop.permute.xlu0 %788
    %v794 = vunpack.c.l.b16 %v720
    %v795 = vunpack.c.l.b16 %v721
    %v796 = vunpack.c.l.b16 %v722
    %v797 = vunpack.c.l.b16 %v723
    %v798 = vpack.c.b16 %v795, %v794
    %v799 = vpack.c.b16 %v797, %v796
    %v803 = vsel %vm132, %v789, 0
    %805 = vmatprep.subr.bf16.mxu0 0
    %806 = vmatpush1.bf16.msra.mxu0 %v798
    %807 = vmatprep.subr.bf16.mxu0 0
    %808 = vmatpush1.bf16.msra.mxu0 %v799
    %809 = vmatprep.subr.bf16.mxu0 0
    %810 = vmatpush1.bf16.msra.mxu0 0
    %811 = vmatprep.subr.bf16.mxu0 0
    %812 = vmatpush1.bf16.msra.mxu0 0
    %813 = vmatprep.subr.bf16.mxu0 0
    %814 = vmatpush1.bf16.msra.mxu0 0
    %815 = vmatprep.subr.bf16.mxu0 0
    %816 = vmatpush1.bf16.msra.mxu0 0
    %817 = vmatprep.subr.bf16.mxu0 0
    %818 = vmatpush1.bf16.msra.mxu0 0
    %819 = vmatprep.subr.bf16.mxu0 0
    %820 = vmatpush1.bf16.msra.mxu0 0
    %821 = vmatprep.subr.bf16.mxu0 0
    %822 = vmatpush1.bf16.msra.mxu0 0
    %823 = vmatprep.subr.bf16.mxu0 0
    %824 = vmatpush1.bf16.msra.mxu0 0
    %825 = vmatprep.subr.bf16.mxu0 0
    %826 = vmatpush1.bf16.msra.mxu0 0
    %827 = vmatprep.subr.bf16.mxu0 0
    %828 = vmatpush1.bf16.msra.mxu0 0
    %829 = vmatprep.subr.bf16.mxu0 0
    %830 = vmatpush1.bf16.msra.mxu0 0
    %831 = vmatprep.subr.bf16.mxu0 0
    %832 = vmatpush1.bf16.msra.mxu0 0
    %833 = vmatprep.subr.bf16.mxu0 0
    %834 = vmatpush1.bf16.msra.mxu0 0
    %835 = vmatprep.subr.bf16.mxu0 0
    %836 = vmatpush1.bf16.msra.mxu0 0
    %837 = vmatprep.mubr.bf16.mxu0 0
    %838 = vmatmul.mubr.bf16.gmra.mrb[0].mxu0 %v803
    %v839 = vpop.f32.mrb[0].mxu0
    %v840 = vadd.f32 %v782, %v839
    %v841 = vpop.f32.mrb[0].mxu0
    %v842 = vpop.f32.mrb[0].mxu0
    %v843 = vpop.f32.mrb[0].mxu0
    %844 = vdwg.mxu0
    %v845 = vld [vmem:[%s5] sm:$0x1]
    %v847 = vlaneseq
    %v848 = vshrl.u32 %v847, 7
    %v849 = vsub.s32 0, %v848
    %v850 = vrot.slane %v845, %v849
    %v852 = vadd.f32 %v840, %v850
    %v853 = vmax.f32 %v852, 0.0
    %v854 = vpack.c.bf16 %v853, %v853
    %v855 = vld [vmem:[%s6] sm:$0xf]
    %v856 = vld [vmem:[%s6 + $0x4] sm:$0xf]
    %v857 = vld [vmem:[%s6 + $0x8] sm:$0xf]
    %v858 = vld [vmem:[%s6 + $0xc] sm:$0xf]
    %v859 = vld [vmem:[%s7] sm:$0x1]
    %v861 = vlaneseq
    %v862 = vshrl.u32 %v861, 7
    %v863 = vsub.s32 0, %v862
    %v864 = vrot.slane %v859, %v863
    %v870 = vunpack.c.l.b16 %v855
    %v871 = vunpack.c.l.b16 %v856
    %v872 = vunpack.c.l.b16 %v857
    %v873 = vunpack.c.l.b16 %v858
    %v874 = vpack.c.b16 %v871, %v870
    %v875 = vpack.c.b16 %v873, %v872
    %v879 = vsel %vm132, %v854, 0
    %881 = vmatprep.subr.bf16.mxu0 0
    %882 = vmatpush1.bf16.msra.mxu0 %v874
    %883 = vmatprep.subr.bf16.mxu0 0
    %884 = vmatpush1.bf16.msra.mxu0 %v875
    %885 = vmatprep.subr.bf16.mxu0 0
    %886 = vmatpush1.bf16.msra.mxu0 0
    %887 = vmatprep.subr.bf16.mxu0 0
    %888 = vmatpush1.bf16.msra.mxu0 0
    %889 = vmatprep.subr.bf16.mxu0 0
    %890 = vmatpush1.bf16.msra.mxu0 0
    %891 = vmatprep.subr.bf16.mxu0 0
    %892 = vmatpush1.bf16.msra.mxu0 0
    %893 = vmatprep.subr.bf16.mxu0 0
    %894 = vmatpush1.bf16.msra.mxu0 0
    %895 = vmatprep.subr.bf16.mxu0 0
    %896 = vmatpush1.bf16.msra.mxu0 0
    %897 = vmatprep.subr.bf16.mxu0 0
    %898 = vmatpush1.bf16.msra.mxu0 0
    %899 = vmatprep.subr.bf16.mxu0 0
    %900 = vmatpush1.bf16.msra.mxu0 0
    %901 = vmatprep.subr.bf16.mxu0 0
    %902 = vmatpush1.bf16.msra.mxu0 0
    %903 = vmatprep.subr.bf16.mxu0 0
    %904 = vmatpush1.bf16.msra.mxu0 0
    %905 = vmatprep.subr.bf16.mxu0 0
    %906 = vmatpush1.bf16.msra.mxu0 0
    %907 = vmatprep.subr.bf16.mxu0 0
    %908 = vmatpush1.bf16.msra.mxu0 0
    %909 = vmatprep.subr.bf16.mxu0 0
    %910 = vmatpush1.bf16.msra.mxu0 0
    %911 = vmatprep.subr.bf16.mxu0 0
    %912 = vmatpush1.bf16.msra.mxu0 0
    %913 = vmatprep.mubr.bf16.mxu0 0
    %914 = vmatmul.mubr.bf16.gmra.mrb[0].mxu0 %v879
    %v915 = vpop.f32.mrb[0].mxu0
    %v916 = vadd.f32 %v864, %v915
    %v917 = vpop.f32.mrb[0].mxu0
    %v918 = vpop.f32.mrb[0].mxu0
    %v919 = vpop.f32.mrb[0].mxu0
    %920 = vdwg.mxu0
    %921 = vst [vmem:[%s8] sm:$0xff] %v916
    // Predicated region
    $region38: #{lstm_classifier_forward.1} parent=1 // pred_check
      _
    $region39: #{lstm_classifier_forward.1} parent=1 // pred_check_branch
      %923 = sbr.rel (0) target = $region41
    $region40: #{lstm_classifier_forward.1} parent=1 // pred_region
      _
    $region41: #{lstm_classifier_forward.1} parent=1 // pred_fallthru
      _
    // Predicated region
    $region42: #{lstm_classifier_forward.1} parent=1 // pred_check
      _
    $region43: #{lstm_classifier_forward.1} parent=1 // pred_check_branch
      %925 = sbr.rel (0) target = $region45
    $region44: #{lstm_classifier_forward.1} parent=1 // pred_region
      _
    $region45: #{lstm_classifier_forward.1} parent=1 // pred_fallthru
      _
    %926 = vsyncpa [#allocation4], 1

</llo_original>
